<compile_context>
chip_gen: v6e
topology: v6e:2x2x1
jax: 0.10.0
libtpu: 0.0.40
codegen_flags: <defaults>
</compile_context>

<pallas_src>
import functools
import math

import jax
import jax.numpy as jnp
from jax.experimental import pallas as pl
from jax.experimental.pallas import tpu as pltpu

_LANE = 128
_SUBLANE = 8
_SQRT_2 = math.sqrt(2.0)
_SQRT_2_OVER_PI = math.sqrt(2.0 / math.pi)

# Lazily probed: does this jax build accept pl.Buffered(1) on a BlockSpec?
_SINGLE_BUFFER_OK = None


def _gelu(x, approximate=False):
    if approximate:
        # tanh-approximate GELU: tanh runs on the EUP (otherwise-idle slot).
        return 0.5 * x * (1.0 + jnp.tanh(_SQRT_2_OVER_PI * (x + 0.044715 * x * x * x)))
    # PyTorch nn.GELU() default: exact erf-based GELU.
    return 0.5 * x * (1.0 + jax.lax.erf(x / _SQRT_2))


def _round_up(x, m):
    return (x + m - 1) // m * m


def _pad2(a, rows, cols):
    return jnp.pad(a, ((0, rows - a.shape[0]), (0, cols - a.shape[1])))


def _mlp_kernel(x_ref, w1_ref, b1_ref, w2_ref, b2_ref, w3_ref, b3_ref, o_ref,
                *, approximate_gelu=False):
    # x / weights arrive as bf16; MXU accumulates in f32, bias+GELU stay in f32.
    h1 = jnp.dot(x_ref[...], w1_ref[...], preferred_element_type=jnp.float32)
    h1 = _gelu(h1 + b1_ref[...], approximate_gelu)
    # dropout (p=0.5) -> identity in eval mode

    h2 = jnp.dot(h1.astype(w2_ref.dtype), w2_ref[...],
                 preferred_element_type=jnp.float32)
    h2 = _gelu(h2 + b2_ref[...], approximate_gelu)
    # dropout (p=0.5) -> identity in eval mode

    out = jnp.dot(h2.astype(w3_ref.dtype), w3_ref[...],
                  preferred_element_type=jnp.float32) + b3_ref[...]
    o_ref[...] = out.astype(o_ref.dtype)


def _build_call(n_p, tm_eff, d_in_p, d_h_p, d_h2_p, d_out_p,
                approximate_gelu, single_buffer):
    kernel = functools.partial(_mlp_kernel, approximate_gelu=approximate_gelu)
    const_map = lambda i: (0, 0)

    if single_buffer:
        # Constant blocks are fetched once; single-buffer them to halve their
        # VMEM footprint (no pipelining needed for a block that never changes).
        wspec = lambda shape: pl.BlockSpec(shape, const_map,
                                           pipeline_mode=pl.Buffered(1))
    else:
        wspec = lambda shape: pl.BlockSpec(shape, const_map)

    return pl.pallas_call(
        kernel,
        out_shape=jax.ShapeDtypeStruct((n_p, d_out_p), jnp.float32),
        grid_spec=pltpu.PrefetchScalarGridSpec(
            num_scalar_prefetch=0,
            grid=(n_p // tm_eff,),
            in_specs=[
                pl.BlockSpec((tm_eff, d_in_p), lambda i: (i, 0)),  # x row tile
                wspec((d_in_p, d_h_p)),    # W1^T
                wspec((1, d_h_p)),         # b1
                wspec((d_h_p, d_h2_p)),    # W2^T
                wspec((1, d_h2_p)),        # b2
                wspec((d_h2_p, d_out_p)),  # W3^T
                wspec((1, d_out_p)),       # b3
            ],
            out_specs=pl.BlockSpec((tm_eff, d_out_p), lambda i: (i, 0)),
        ),
        compiler_params=pltpu.CompilerParams(
            dimension_semantics=("parallel",),
            # Explicit scoped-VMEM budget; footprint at demo sizes is <1 MiB,
            # comfortably inside v7x's 64 MiB physical VMEM.
            vmem_limit_bytes=32 * 1024 * 1024,
        ),
    )


def mlp_forward(x, params, *, tm=128, approximate_gelu=False):
    """x: [..., input_dim] float32. params: transposed [in, out] f32 weights."""
    global _SINGLE_BUFFER_OK

    orig_shape = x.shape
    d_in = orig_shape[-1]
    x2 = x.reshape(-1, d_in)
    N = x2.shape[0]

    w1, b1, w2, b2, w3, b3 = (params[k] for k in ("w1", "b1", "w2", "b2", "w3", "b3"))
    d_h, d_h2, d_out = w1.shape[1], w2.shape[1], w3.shape[1]

    # Lane-pad every feature dim to a multiple of 128 (dense MXU / dense vst).
    d_in_p = _round_up(d_in, _LANE)
    d_h_p = _round_up(d_h, _LANE)
    d_h2_p = _round_up(d_h2, _LANE)
    d_out_p = _round_up(d_out, _LANE)

    # Row tile: fill MXU rows; >=2 grid steps when N allows so the "parallel"
    # axis shards across v7x's two TensorCores. Tiny N collapses to grid=(1,).
    tm_eff = min(tm, _round_up(N, _SUBLANE))
    n_p = _round_up(N, tm_eff)

    # Zero-pad (exact: zero rows/cols contribute nothing, GELU(0)=0) and cast
    # MXU operands to bf16; biases stay f32 for the f32 epilogue.
    x_p = _pad2(x2, n_p, d_in_p).astype(jnp.bfloat16)
    w1_p = _pad2(w1, d_in_p, d_h_p).astype(jnp.bfloat16)
    w2_p = _pad2(w2, d_h_p, d_h2_p).astype(jnp.bfloat16)
    w3_p = _pad2(w3, d_h2_p, d_out_p).astype(jnp.bfloat16)
    b1_p = _pad2(b1, 1, d_h_p).astype(jnp.float32)
    b2_p = _pad2(b2, 1, d_h2_p).astype(jnp.float32)
    b3_p = _pad2(b3, 1, d_out_p).astype(jnp.float32)

    args = (x_p, w1_p, b1_p, w2_p, b2_p, w3_p, b3_p)
    dims = (n_p, tm_eff, d_in_p, d_h_p, d_h2_p, d_out_p)

    if _SINGLE_BUFFER_OK is None:
        # One-time probe: some jax builds reject pipeline_mode on pallas_call
        # BlockSpecs; fall back to default double-buffered weights (perf-only).
        try:
            out_p = jax.block_until_ready(
                _build_call(*dims, approximate_gelu, True)(*args))
            _SINGLE_BUFFER_OK = True
        except Exception:
            _SINGLE_BUFFER_OK = False
            out_p = _build_call(*dims, approximate_gelu, False)(*args)
    else:
        out_p = _build_call(*dims, approximate_gelu, _SINGLE_BUFFER_OK)(*args)

    out = out_p[:N, :d_out]
    return out.reshape(*orig_shape[:-1], d_out)


def init_params(key, input_dim, hidden_dim, output_dim):
    """PyTorch-default Linear init; weights stored transposed as [in, out]."""
    dims = [(input_dim, hidden_dim),
            (hidden_dim, hidden_dim // 2),
            (hidden_dim // 2, output_dim)]
    params = {}
    for idx, (din, dout) in enumerate(dims, start=1):
        key, kw, kb = jax.random.split(key, 3)
        bound = 1.0 / math.sqrt(din)
        w = jax.random.uniform(kw, (dout, din), jnp.float32, -bound, bound)
        b = jax.random.uniform(kb, (dout,), jnp.float32, -bound, bound)
        params[f"w{idx}"] = w.T                 # [in, out]
        params[f"b{idx}"] = b.reshape(1, dout)  # 2D for TPU layout
    return params


def mlp_reference(x, params, *, match_kernel_precision=False, approximate_gelu=False):
    """Pure-JAX reference. match_kernel_precision=True mimics the kernel's
    bf16 matmul inputs with f32 accumulation; False is the full-f32 baseline."""
    cast = (lambda a: a.astype(jnp.bfloat16)) if match_kernel_precision else (
        lambda a: a.astype(jnp.float32))
    dot = lambda a, b: jnp.dot(cast(a), cast(b), preferred_element_type=jnp.float32)
    h = _gelu(dot(x, params["w1"]) + params["b1"], approximate_gelu)
    h = _gelu(dot(h, params["w2"]) + params["b2"], approximate_gelu)
    return dot(h, params["w3"]) + params["b3"]


if __name__ == "__main__":
    key = jax.random.PRNGKey(0)
    input_dim, hidden_dim, output_dim = 32, 64, 16
    batch, seq = 2, 128          # 256 token rows -> two 128-row grid steps

    kx, kp = jax.random.split(key)
    x = jax.random.normal(kx, (batch, seq, input_dim), dtype=jnp.float32)
    params = init_params(kp, input_dim, hidden_dim, output_dim)

    out = mlp_forward(x, params)
    out = jax.block_until_ready(out)
    assert out.shape == (batch, seq, output_dim)

    # Tight check vs a reference using the same bf16-input / f32-accumulate
    # precision, looser check vs the full-f32 reference.
    ref_bf16 = mlp_reference(x, params, match_kernel_precision=True)
    ref_f32 = mlp_reference(x, params, match_kernel_precision=False)
    err_bf16 = float(jnp.max(jnp.abs(out - ref_bf16)))
    err_f32 = float(jnp.max(jnp.abs(out - ref_f32)))
    assert jnp.allclose(out, ref_bf16, atol=1e-3, rtol=1e-3), err_bf16
    assert jnp.allclose(out, ref_f32, atol=5e-2, rtol=5e-2), err_f32

    # Second call exercises the cached (no-probe) fast path.
    out2 = jax.block_until_ready(mlp_forward(x, params))
    assert jnp.array_equal(out, out2)

    print("KERNEL_OK")
</pallas_src>

<mosaic_0001>
module attributes {stable_mosaic.version = 11 : i64} {
  func.func @_mlp_kernel(%arg0: i32, %arg1: memref<128x128xbf16, #tpu.memory_space<vmem>>, %arg2: memref<128x128xbf16, #tpu.memory_space<vmem>>, %arg3: memref<1x128xf32, #tpu.memory_space<vmem>>, %arg4: memref<128x128xbf16, #tpu.memory_space<vmem>>, %arg5: memref<1x128xf32, #tpu.memory_space<vmem>>, %arg6: memref<128x128xbf16, #tpu.memory_space<vmem>>, %arg7: memref<1x128xf32, #tpu.memory_space<vmem>>, %arg8: memref<128x128xf32, #tpu.memory_space<vmem>>) attributes {dimension_semantics = [#tpu.dimension_semantics<parallel>], iteration_bounds = array<i64: 2>, scalar_prefetch = 0 : i64, scratch_operands = 0 : i64, tpu.core_type = #tpu.core_type<tc>, window_params = [{transform_indices = @transform_0, window_bounds = array<i64: 128, 128>}, {pipeline_mode = #tpu.pipeline_mode<synchronous>, transform_indices = @transform_1, window_bounds = array<i64: 128, 128>}, {pipeline_mode = #tpu.pipeline_mode<synchronous>, transform_indices = @transform_2, window_bounds = array<i64: 1, 128>}, {pipeline_mode = #tpu.pipeline_mode<synchronous>, transform_indices = @transform_3, window_bounds = array<i64: 128, 128>}, {pipeline_mode = #tpu.pipeline_mode<synchronous>, transform_indices = @transform_4, window_bounds = array<i64: 1, 128>}, {pipeline_mode = #tpu.pipeline_mode<synchronous>, transform_indices = @transform_5, window_bounds = array<i64: 128, 128>}, {pipeline_mode = #tpu.pipeline_mode<synchronous>, transform_indices = @transform_6, window_bounds = array<i64: 1, 128>}, {transform_indices = @transform_7, window_bounds = array<i64: 128, 128>}]} {
    %c0 = arith.constant 0 : index
    %c0_0 = arith.constant 0 : index
    %0 = vector.load %arg1[%c0, %c0_0] : memref<128x128xbf16, #tpu.memory_space<vmem>>, vector<128x128xbf16>
    %c0_1 = arith.constant 0 : index
    %c0_2 = arith.constant 0 : index
    %1 = vector.load %arg2[%c0_1, %c0_2] : memref<128x128xbf16, #tpu.memory_space<vmem>>, vector<128x128xbf16>
    %cst = arith.constant dense<0.000000e+00> : vector<128x128xf32>
    %2 = tpu.matmul %0, %1, %cst {dimension_numbers = #tpu.dot_dimension_numbers<[1], [0], [0], [1], [0, 0, 1, 1], [], []>} : vector<128x128xbf16>, vector<128x128xbf16>, vector<128x128xf32> -> vector<128x128xf32>
    %c0_3 = arith.constant 0 : index
    %c0_4 = arith.constant 0 : index
    %3 = vector.load %arg3[%c0_3, %c0_4] : memref<1x128xf32, #tpu.memory_space<vmem>>, vector<1x128xf32>
    %4 = vector.broadcast %3 : vector<1x128xf32> to vector<128x128xf32>
    %5 = arith.addf %2, %4 : vector<128x128xf32>
    %cst_5 = arith.constant 5.000000e-01 : f32
    %6 = vector.broadcast %cst_5 : f32 to vector<128x128xf32>
    %7 = arith.mulf %6, %5 : vector<128x128xf32>
    %cst_6 = arith.constant 1.41421354 : f32
    %8 = vector.broadcast %cst_6 : f32 to vector<128x128xf32>
    %9 = arith.divf %5, %8 : vector<128x128xf32>
    %10 = math.erf %9 : vector<128x128xf32>
    %cst_7 = arith.constant 1.000000e+00 : f32
    %11 = vector.broadcast %cst_7 : f32 to vector<128x128xf32>
    %12 = arith.addf %11, %10 : vector<128x128xf32>
    %13 = arith.mulf %7, %12 : vector<128x128xf32>
    %14 = arith.truncf %13 : vector<128x128xf32> to vector<128x128xbf16>
    %c0_8 = arith.constant 0 : index
    %c0_9 = arith.constant 0 : index
    %15 = vector.load %arg4[%c0_8, %c0_9] : memref<128x128xbf16, #tpu.memory_space<vmem>>, vector<128x128xbf16>
    %cst_10 = arith.constant dense<0.000000e+00> : vector<128x128xf32>
    %16 = tpu.matmul %14, %15, %cst_10 {dimension_numbers = #tpu.dot_dimension_numbers<[1], [0], [0], [1], [0, 0, 1, 1], [], []>} : vector<128x128xbf16>, vector<128x128xbf16>, vector<128x128xf32> -> vector<128x128xf32>
    %c0_11 = arith.constant 0 : index
    %c0_12 = arith.constant 0 : index
    %17 = vector.load %arg5[%c0_11, %c0_12] : memref<1x128xf32, #tpu.memory_space<vmem>>, vector<1x128xf32>
    %18 = vector.broadcast %17 : vector<1x128xf32> to vector<128x128xf32>
    %19 = arith.addf %16, %18 : vector<128x128xf32>
    %cst_13 = arith.constant 5.000000e-01 : f32
    %20 = vector.broadcast %cst_13 : f32 to vector<128x128xf32>
    %21 = arith.mulf %20, %19 : vector<128x128xf32>
    %cst_14 = arith.constant 1.41421354 : f32
    %22 = vector.broadcast %cst_14 : f32 to vector<128x128xf32>
    %23 = arith.divf %19, %22 : vector<128x128xf32>
    %24 = math.erf %23 : vector<128x128xf32>
    %cst_15 = arith.constant 1.000000e+00 : f32
    %25 = vector.broadcast %cst_15 : f32 to vector<128x128xf32>
    %26 = arith.addf %25, %24 : vector<128x128xf32>
    %27 = arith.mulf %21, %26 : vector<128x128xf32>
    %28 = arith.truncf %27 : vector<128x128xf32> to vector<128x128xbf16>
    %c0_16 = arith.constant 0 : index
    %c0_17 = arith.constant 0 : index
    %29 = vector.load %arg6[%c0_16, %c0_17] : memref<128x128xbf16, #tpu.memory_space<vmem>>, vector<128x128xbf16>
    %cst_18 = arith.constant dense<0.000000e+00> : vector<128x128xf32>
    %30 = tpu.matmul %28, %29, %cst_18 {dimension_numbers = #tpu.dot_dimension_numbers<[1], [0], [0], [1], [0, 0, 1, 1], [], []>} : vector<128x128xbf16>, vector<128x128xbf16>, vector<128x128xf32> -> vector<128x128xf32>
    %c0_19 = arith.constant 0 : index
    %c0_20 = arith.constant 0 : index
    %31 = vector.load %arg7[%c0_19, %c0_20] : memref<1x128xf32, #tpu.memory_space<vmem>>, vector<1x128xf32>
    %32 = vector.broadcast %31 : vector<1x128xf32> to vector<128x128xf32>
    %33 = arith.addf %30, %32 : vector<128x128xf32>
    %c0_21 = arith.constant 0 : index
    %c0_22 = arith.constant 0 : index
    %34 = vector.load %arg8[%c0_21, %c0_22] : memref<128x128xf32, #tpu.memory_space<vmem>>, vector<128x128xf32>
    tpu.vector_store %arg8[%c0_21, %c0_22], %33 {strides = array<i32>} : memref<128x128xf32, #tpu.memory_space<vmem>>, vector<128x128xf32>,
    return
  }
  func.func @transform_0(%arg0: i32) -> (i32, i32) {
    %c0_i32 = arith.constant 0 : i32
    %c0_i32_0 = arith.constant 0 : i32
    return %arg0, %c0_i32 : i32, i32
  }
  func.func @transform_1(%arg0: i32) -> (i32, i32) {
    %c0_i32 = arith.constant 0 : i32
    %c0_i32_0 = arith.constant 0 : i32
    %c0_i32_1 = arith.constant 0 : i32
    return %c0_i32, %c0_i32_0 : i32, i32
  }
  func.func @transform_2(%arg0: i32) -> (i32, i32) {
    %c0_i32 = arith.constant 0 : i32
    %c0_i32_0 = arith.constant 0 : i32
    %c0_i32_1 = arith.constant 0 : i32
    return %c0_i32, %c0_i32_0 : i32, i32
  }
  func.func @transform_3(%arg0: i32) -> (i32, i32) {
    %c0_i32 = arith.constant 0 : i32
    %c0_i32_0 = arith.constant 0 : i32
    %c0_i32_1 = arith.constant 0 : i32
    return %c0_i32, %c0_i32_0 : i32, i32
  }
  func.func @transform_4(%arg0: i32) -> (i32, i32) {
    %c0_i32 = arith.constant 0 : i32
    %c0_i32_0 = arith.constant 0 : i32
    %c0_i32_1 = arith.constant 0 : i32
    return %c0_i32, %c0_i32_0 : i32, i32
  }
  func.func @transform_5(%arg0: i32) -> (i32, i32) {
    %c0_i32 = arith.constant 0 : i32
    %c0_i32_0 = arith.constant 0 : i32
    %c0_i32_1 = arith.constant 0 : i32
    return %c0_i32, %c0_i32_0 : i32, i32
  }
  func.func @transform_6(%arg0: i32) -> (i32, i32) {
    %c0_i32 = arith.constant 0 : i32
    %c0_i32_0 = arith.constant 0 : i32
    %c0_i32_1 = arith.constant 0 : i32
    return %c0_i32, %c0_i32_0 : i32, i32
  }
  func.func @transform_7(%arg0: i32) -> (i32, i32) {
    %c0_i32 = arith.constant 0 : i32
    %c0_i32_0 = arith.constant 0 : i32
    return %arg0, %c0_i32 : i32, i32
  }
}

module attributes {stable_mosaic.version = 11 : i64} {
  func.func @_mlp_kernel(%arg0: i32, %arg1: memref<128x128xbf16, #tpu.memory_space<vmem>>, %arg2: memref<128x128xbf16, #tpu.memory_space<vmem>>, %arg3: memref<1x128xf32, #tpu.memory_space<vmem>>, %arg4: memref<128x128xbf16, #tpu.memory_space<vmem>>, %arg5: memref<1x128xf32, #tpu.memory_space<vmem>>, %arg6: memref<128x128xbf16, #tpu.memory_space<vmem>>, %arg7: memref<1x128xf32, #tpu.memory_space<vmem>>, %arg8: memref<128x128xf32, #tpu.memory_space<vmem>>) attributes {dimension_semantics = [#tpu.dimension_semantics<parallel>], iteration_bounds = array<i64: 2>, scalar_prefetch = 0 : i64, scratch_operands = 0 : i64, tpu.core_type = #tpu.core_type<tc>, window_params = [{transform_indices = @transform_0, window_bounds = array<i64: 128, 128>}, {pipeline_mode = #tpu.pipeline_mode<synchronous>, transform_indices = @transform_1, window_bounds = array<i64: 128, 128>}, {pipeline_mode = #tpu.pipeline_mode<synchronous>, transform_indices = @transform_2, window_bounds = array<i64: 1, 128>}, {pipeline_mode = #tpu.pipeline_mode<synchronous>, transform_indices = @transform_3, window_bounds = array<i64: 128, 128>}, {pipeline_mode = #tpu.pipeline_mode<synchronous>, transform_indices = @transform_4, window_bounds = array<i64: 1, 128>}, {pipeline_mode = #tpu.pipeline_mode<synchronous>, transform_indices = @transform_5, window_bounds = array<i64: 128, 128>}, {pipeline_mode = #tpu.pipeline_mode<synchronous>, transform_indices = @transform_6, window_bounds = array<i64: 1, 128>}, {transform_indices = @transform_7, window_bounds = array<i64: 128, 128>}]} {
    %c0 = arith.constant 0 : index
    %c0_0 = arith.constant 0 : index
    %0 = vector.load %arg1[%c0, %c0_0] : memref<128x128xbf16, #tpu.memory_space<vmem>>, vector<128x128xbf16>
    %c0_1 = arith.constant 0 : index
    %c0_2 = arith.constant 0 : index
    %1 = vector.load %arg2[%c0_1, %c0_2] : memref<128x128xbf16, #tpu.memory_space<vmem>>, vector<128x128xbf16>
    %cst = arith.constant dense<0.000000e+00> : vector<128x128xf32>
    %2 = tpu.matmul %0, %1, %cst {dimension_numbers = #tpu.dot_dimension_numbers<[1], [0], [0], [1], [0, 0, 1, 1], [], []>} : vector<128x128xbf16>, vector<128x128xbf16>, vector<128x128xf32> -> vector<128x128xf32>
    %c0_3 = arith.constant 0 : index
    %c0_4 = arith.constant 0 : index
    %3 = vector.load %arg3[%c0_3, %c0_4] : memref<1x128xf32, #tpu.memory_space<vmem>>, vector<1x128xf32>
    %4 = vector.broadcast %3 : vector<1x128xf32> to vector<128x128xf32>
    %5 = arith.addf %2, %4 : vector<128x128xf32>
    %cst_5 = arith.constant 5.000000e-01 : f32
    %6 = vector.broadcast %cst_5 : f32 to vector<128x128xf32>
    %7 = arith.mulf %6, %5 : vector<128x128xf32>
    %cst_6 = arith.constant 1.41421354 : f32
    %8 = vector.broadcast %cst_6 : f32 to vector<128x128xf32>
    %9 = arith.divf %5, %8 : vector<128x128xf32>
    %10 = math.erf %9 : vector<128x128xf32>
    %cst_7 = arith.constant 1.000000e+00 : f32
    %11 = vector.broadcast %cst_7 : f32 to vector<128x128xf32>
    %12 = arith.addf %11, %10 : vector<128x128xf32>
    %13 = arith.mulf %7, %12 : vector<128x128xf32>
    %14 = arith.truncf %13 : vector<128x128xf32> to vector<128x128xbf16>
    %c0_8 = arith.constant 0 : index
    %c0_9 = arith.constant 0 : index
    %15 = vector.load %arg4[%c0_8, %c0_9] : memref<128x128xbf16, #tpu.memory_space<vmem>>, vector<128x128xbf16>
    %cst_10 = arith.constant dense<0.000000e+00> : vector<128x128xf32>
    %16 = tpu.matmul %14, %15, %cst_10 {dimension_numbers = #tpu.dot_dimension_numbers<[1], [0], [0], [1], [0, 0, 1, 1], [], []>} : vector<128x128xbf16>, vector<128x128xbf16>, vector<128x128xf32> -> vector<128x128xf32>
    %c0_11 = arith.constant 0 : index
    %c0_12 = arith.constant 0 : index
    %17 = vector.load %arg5[%c0_11, %c0_12] : memref<1x128xf32, #tpu.memory_space<vmem>>, vector<1x128xf32>
    %18 = vector.broadcast %17 : vector<1x128xf32> to vector<128x128xf32>
    %19 = arith.addf %16, %18 : vector<128x128xf32>
    %cst_13 = arith.constant 5.000000e-01 : f32
    %20 = vector.broadcast %cst_13 : f32 to vector<128x128xf32>
    %21 = arith.mulf %20, %19 : vector<128x128xf32>
    %cst_14 = arith.constant 1.41421354 : f32
    %22 = vector.broadcast %cst_14 : f32 to vector<128x128xf32>
    %23 = arith.divf %19, %22 : vector<128x128xf32>
    %24 = math.erf %23 : vector<128x128xf32>
    %cst_15 = arith.constant 1.000000e+00 : f32
    %25 = vector.broadcast %cst_15 : f32 to vector<128x128xf32>
    %26 = arith.addf %25, %24 : vector<128x128xf32>
    %27 = arith.mulf %21, %26 : vector<128x128xf32>
    %28 = arith.truncf %27 : vector<128x128xf32> to vector<128x128xbf16>
    %c0_16 = arith.constant 0 : index
    %c0_17 = arith.constant 0 : index
    %29 = vector.load %arg6[%c0_16, %c0_17] : memref<128x128xbf16, #tpu.memory_space<vmem>>, vector<128x128xbf16>
    %cst_18 = arith.constant dense<0.000000e+00> : vector<128x128xf32>
    %30 = tpu.matmul %28, %29, %cst_18 {dimension_numbers = #tpu.dot_dimension_numbers<[1], [0], [0], [1], [0, 0, 1, 1], [], []>} : vector<128x128xbf16>, vector<128x128xbf16>, vector<128x128xf32> -> vector<128x128xf32>
    %c0_19 = arith.constant 0 : index
    %c0_20 = arith.constant 0 : index
    %31 = vector.load %arg7[%c0_19, %c0_20] : memref<1x128xf32, #tpu.memory_space<vmem>>, vector<1x128xf32>
    %32 = vector.broadcast %31 : vector<1x128xf32> to vector<128x128xf32>
    %33 = arith.addf %30, %32 : vector<128x128xf32>
    %c0_21 = arith.constant 0 : index
    %c0_22 = arith.constant 0 : index
    %34 = vector.load %arg8[%c0_21, %c0_22] : memref<128x128xf32, #tpu.memory_space<vmem>>, vector<128x128xf32>
    tpu.vector_store %arg8[%c0_21, %c0_22], %33 {strides = array<i32>} : memref<128x128xf32, #tpu.memory_space<vmem>>, vector<128x128xf32>,
    return
  }
  func.func @transform_0(%arg0: i32) -> (i32, i32) {
    %c0_i32 = arith.constant 0 : i32
    %c0_i32_0 = arith.constant 0 : i32
    return %arg0, %c0_i32 : i32, i32
  }
  func.func @transform_1(%arg0: i32) -> (i32, i32) {
    %c0_i32 = arith.constant 0 : i32
    %c0_i32_0 = arith.constant 0 : i32
    %c0_i32_1 = arith.constant 0 : i32
    return %c0_i32, %c0_i32_0 : i32, i32
  }
  func.func @transform_2(%arg0: i32) -> (i32, i32) {
    %c0_i32 = arith.constant 0 : i32
    %c0_i32_0 = arith.constant 0 : i32
    %c0_i32_1 = arith.constant 0 : i32
    return %c0_i32, %c0_i32_0 : i32, i32
  }
  func.func @transform_3(%arg0: i32) -> (i32, i32) {
    %c0_i32 = arith.constant 0 : i32
    %c0_i32_0 = arith.constant 0 : i32
    %c0_i32_1 = arith.constant 0 : i32
    return %c0_i32, %c0_i32_0 : i32, i32
  }
  func.func @transform_4(%arg0: i32) -> (i32, i32) {
    %c0_i32 = arith.constant 0 : i32
    %c0_i32_0 = arith.constant 0 : i32
    %c0_i32_1 = arith.constant 0 : i32
    return %c0_i32, %c0_i32_0 : i32, i32
  }
  func.func @transform_5(%arg0: i32) -> (i32, i32) {
    %c0_i32 = arith.constant 0 : i32
    %c0_i32_0 = arith.constant 0 : i32
    %c0_i32_1 = arith.constant 0 : i32
    return %c0_i32, %c0_i32_0 : i32, i32
  }
  func.func @transform_6(%arg0: i32) -> (i32, i32) {
    %c0_i32 = arith.constant 0 : i32
    %c0_i32_0 = arith.constant 0 : i32
    %c0_i32_1 = arith.constant 0 : i32
    return %c0_i32, %c0_i32_0 : i32, i32
  }
  func.func @transform_7(%arg0: i32) -> (i32, i32) {
    %c0_i32 = arith.constant 0 : i32
    %c0_i32_0 = arith.constant 0 : i32
    return %arg0, %c0_i32 : i32, i32
  }
}

</mosaic_0001>

<llo_original>
// kernel: tpu_custom_call.1
$region0: #{tpu_custom_call.1}
  #allocation0 [shape = 'u32[]', space=smem, size = 0x4, offset = 0x4, fixed_abs, tag = 'smem constant byte address 0x4 - core index']
  #allocation1 [shape = 'u32[144,128]{1,0:T(1,128)}', space=vmem, size = 0x12000, scoped, tag = 'internal scratch']
  %s0 = inlined_call_operand.hbm [shape: bf16[256,128], index: 0, kind: input, shape index: {}]
  %s1 = inlined_call_operand.hbm [shape: bf16[128,128], index: 1, kind: input, shape index: {}]
  %s2 = inlined_call_operand.vmem [shape: f32[1,128], index: 2, kind: input, shape index: {}]
  %s3 = inlined_call_operand.hbm [shape: bf16[128,128], index: 3, kind: input, shape index: {}]
  %s4 = inlined_call_operand.vmem [shape: f32[1,128], index: 4, kind: input, shape index: {}]
  %s5 = inlined_call_operand.hbm [shape: bf16[128,128], index: 5, kind: input, shape index: {}]
  %s6 = inlined_call_operand.vmem [shape: f32[1,128], index: 6, kind: input, shape index: {}]
  %s7 = inlined_call_operand.hbm [shape: f32[256,128], index: 7, kind: output, shape index: {}]
  %s8 = sld [smem:[#allocation0]]
  $region77: #{tpu_custom_call.1} parent=0
    _
  %s10 = ssub.s32 1, %s8
  %s11 = scalar_select 0, %s10, %s8
  $region1: #{tpu_custom_call.1} parent=0
    #allocation2 [shape = 'u8[65536]{0}', space=vmem, size = 0x10000, scoped, tag = 'input window, operand 0']
    #allocation3 [shape = 's32[2]{0}', space=sflag, size = 0x8, scoped, tag = 'scoped memory for tpu_custom_call.1']
    #allocation4 [shape = 's32[2]{0}', space=sflag, size = 0x8, scoped, tag = 'scoped memory for tpu_custom_call.1']
    #allocation5 [shape = 'u8[32768]{0}', space=vmem, size = 0x8000, scoped, tag = 'input window, operand 1, single buffered']
    #allocation6 [shape = 's32[1]{0}', space=sflag, size = 0x4, scoped, tag = 'scoped memory for tpu_custom_call.1']
    #allocation7 [shape = 'u8[32768]{0}', space=vmem, size = 0x8000, scoped, tag = 'input window, operand 3, single buffered']
    #allocation8 [shape = 'u8[32768]{0}', space=vmem, size = 0x8000, scoped, tag = 'input window, operand 5, single buffered']
    #allocation9 [shape = 's32[1]{0}', space=sflag, size = 0x4, scoped, tag = 'scoped memory for tpu_custom_call.1']
    #allocation10 [shape = 'u8[131072]{0}', space=vmem, size = 0x20000, scoped, tag = 'output window, operand 0']
    %12 = vsyncpa [#allocation3], 0
    %s13 = scalar_lea.sflag [#allocation3], 1
    %14 = vsyncpa %s13, 0
    %15 = vsyncpa [#allocation6], 0
    %16 = vsyncpa [#allocation9], 0
    %17 = vsyncpa [#allocation4], 0
    %s18 = scalar_lea.sflag [#allocation4], 1
    %19 = vsyncpa %s18, 0
    loop: start=0, step=1, limit=4
    $region2: #{tpu_custom_call.1} parent=1 // loop_pre_header
      _
    $region3: #{tpu_custom_call.1} parent=1 // loop_header
      %s21 = sphi 0, %s25
      %p22 = scmp.ge.s32.totalorder %s21, 4
      %s31 = sphi 0, %s33
      %s34 = sphi 0, %s31
      %s35 = sphi 0, %s34
      %s51 = sphi 0, %s35
      %s55 = sphi 0, %s55
      %s57 = sphi 0, %s55
      %s58 = sphi 0, %s57
      %s72 = sphi 0, %s58
      %s76 = sphi 0, %s76
      %s78 = sphi 0, %s76
      %s79 = sphi 0, %s78
      %s93 = sphi 0, %s79
      %s97 = sphi 0, %s97
      %s99 = sphi 0, %s97
      %s100 = sphi 0, %s99
      %s114 = sphi 0, %s100
      %s118 = sphi 0, %s118
      %s120 = sphi 0, %s118
      %s121 = sphi 0, %s120
      %s135 = sphi 0, %s121
      %s139 = sphi 0, %s139
      %s141 = sphi 0, %s139
      %s142 = sphi 0, %s141
      %s156 = sphi 0, %s142
      %s160 = sphi 0, %s160
      %s162 = sphi 0, %s160
      %s163 = sphi 0, %s162
      %s177 = sphi 0, %s163
      %s183 = sphi 0, %s185
      %s186 = sphi 0, %s183
      %s187 = sphi 0, %s186
      %s203 = sphi 0, %s187
    $region4: #{tpu_custom_call.1} parent=1 // loop_header_branch
      %24 = sbr.rel (%p22) target = $region8
    $region5: #{tpu_custom_call.1} parent=1 // loop_body
      %s26 = ssub.s32 %s21, 1
      %s27 = ssub.s32 %s21, 2
      %s28 = sadd.s32 %s21, 1
      %s29 = ssub.s32 %s21, %s28
      %p30 = scmp.eq.s32.totalorder %s29, 0
      %s32 = sadd.s32 %s31, 1
      %s33 = scalar_select %p30, %s31, %s32
      %p36 = pneg %p30
      %p37 = scmp.eq.s32.totalorder %s21, 1
      %p38 = por %p36, %p37
      %p39 = scmp.ne.s32.totalorder %s31, %s34
      %p40 = scmp.eq.s32.totalorder %s21, 0
      %p41 = por %p39, %p40
      %p42 = scmp.ne.s32.totalorder %s31, %s34
      %p43 = scmp.eq.s32.totalorder %s26, 1
      %p44 = por %p42, %p43
      %p45 = scmp.ne.s32.totalorder %s34, %s35
      %p46 = scmp.eq.s32.totalorder %s26, 0
      %p47 = por %p45, %p46
      %p48 = scmp.ne.s32.totalorder %s34, %s35
      %p49 = scmp.eq.s32.totalorder %s27, 1
      %p50 = por %p48, %p49
      %p52 = scmp.ne.s32.totalorder %s35, %s51
      %p53 = scmp.eq.s32.totalorder %s27, 0
      %p54 = por %p52, %p53
      %s56 = sadd.s32 %s55, 1
      %p59 = scmp.eq.s32.totalorder %s21, 1
      %p60 = scmp.ne.s32.totalorder %s55, %s57
      %p61 = scmp.eq.s32.totalorder %s21, 0
      %p62 = por %p60, %p61
      %p63 = scmp.ne.s32.totalorder %s55, %s57
      %p64 = scmp.eq.s32.totalorder %s26, 1
      %p65 = por %p63, %p64
      %p66 = scmp.ne.s32.totalorder %s57, %s58
      %p67 = scmp.eq.s32.totalorder %s26, 0
      %p68 = por %p66, %p67
      %p69 = scmp.ne.s32.totalorder %s57, %s58
      %p70 = scmp.eq.s32.totalorder %s27, 1
      %p71 = por %p69, %p70
      %p73 = scmp.ne.s32.totalorder %s58, %s72
      %p74 = scmp.eq.s32.totalorder %s27, 0
      %p75 = por %p73, %p74
      %s77 = sadd.s32 %s76, 1
      %p80 = scmp.eq.s32.totalorder %s21, 1
      %p81 = scmp.ne.s32.totalorder %s76, %s78
      %p82 = scmp.eq.s32.totalorder %s21, 0
      %p83 = por %p81, %p82
      %p84 = scmp.ne.s32.totalorder %s76, %s78
      %p85 = scmp.eq.s32.totalorder %s26, 1
      %p86 = por %p84, %p85
      %p87 = scmp.ne.s32.totalorder %s78, %s79
      %p88 = scmp.eq.s32.totalorder %s26, 0
      %p89 = por %p87, %p88
      %p90 = scmp.ne.s32.totalorder %s78, %s79
      %p91 = scmp.eq.s32.totalorder %s27, 1
      %p92 = por %p90, %p91
      %p94 = scmp.ne.s32.totalorder %s79, %s93
      %p95 = scmp.eq.s32.totalorder %s27, 0
      %p96 = por %p94, %p95
      %s98 = sadd.s32 %s97, 1
      %p101 = scmp.eq.s32.totalorder %s21, 1
      %p102 = scmp.ne.s32.totalorder %s97, %s99
      %p103 = scmp.eq.s32.totalorder %s21, 0
      %p104 = por %p102, %p103
      %p105 = scmp.ne.s32.totalorder %s97, %s99
      %p106 = scmp.eq.s32.totalorder %s26, 1
      %p107 = por %p105, %p106
      %p108 = scmp.ne.s32.totalorder %s99, %s100
      %p109 = scmp.eq.s32.totalorder %s26, 0
      %p110 = por %p108, %p109
      %p111 = scmp.ne.s32.totalorder %s99, %s100
      %p112 = scmp.eq.s32.totalorder %s27, 1
      %p113 = por %p111, %p112
      %p115 = scmp.ne.s32.totalorder %s100, %s114
      %p116 = scmp.eq.s32.totalorder %s27, 0
      %p117 = por %p115, %p116
      %s119 = sadd.s32 %s118, 1
      %p122 = scmp.eq.s32.totalorder %s21, 1
      %p123 = scmp.ne.s32.totalorder %s118, %s120
      %p124 = scmp.eq.s32.totalorder %s21, 0
      %p125 = por %p123, %p124
      %p126 = scmp.ne.s32.totalorder %s118, %s120
      %p127 = scmp.eq.s32.totalorder %s26, 1
      %p128 = por %p126, %p127
      %p129 = scmp.ne.s32.totalorder %s120, %s121
      %p130 = scmp.eq.s32.totalorder %s26, 0
      %p131 = por %p129, %p130
      %p132 = scmp.ne.s32.totalorder %s120, %s121
      %p133 = scmp.eq.s32.totalorder %s27, 1
      %p134 = por %p132, %p133
      %p136 = scmp.ne.s32.totalorder %s121, %s135
      %p137 = scmp.eq.s32.totalorder %s27, 0
      %p138 = por %p136, %p137
      %s140 = sadd.s32 %s139, 1
      %p143 = scmp.eq.s32.totalorder %s21, 1
      %p144 = scmp.ne.s32.totalorder %s139, %s141
      %p145 = scmp.eq.s32.totalorder %s21, 0
      %p146 = por %p144, %p145
      %p147 = scmp.ne.s32.totalorder %s139, %s141
      %p148 = scmp.eq.s32.totalorder %s26, 1
      %p149 = por %p147, %p148
      %p150 = scmp.ne.s32.totalorder %s141, %s142
      %p151 = scmp.eq.s32.totalorder %s26, 0
      %p152 = por %p150, %p151
      %p153 = scmp.ne.s32.totalorder %s141, %s142
      %p154 = scmp.eq.s32.totalorder %s27, 1
      %p155 = por %p153, %p154
      %p157 = scmp.ne.s32.totalorder %s142, %s156
      %p158 = scmp.eq.s32.totalorder %s27, 0
      %p159 = por %p157, %p158
      %s161 = sadd.s32 %s160, 1
      %p164 = scmp.eq.s32.totalorder %s21, 1
      %p165 = scmp.ne.s32.totalorder %s160, %s162
      %p166 = scmp.eq.s32.totalorder %s21, 0
      %p167 = por %p165, %p166
      %p168 = scmp.ne.s32.totalorder %s160, %s162
      %p169 = scmp.eq.s32.totalorder %s26, 1
      %p170 = por %p168, %p169
      %p171 = scmp.ne.s32.totalorder %s162, %s163
      %p172 = scmp.eq.s32.totalorder %s26, 0
      %p173 = por %p171, %p172
      %p174 = scmp.ne.s32.totalorder %s162, %s163
      %p175 = scmp.eq.s32.totalorder %s27, 1
      %p176 = por %p174, %p175
      %p178 = scmp.ne.s32.totalorder %s163, %s177
      %p179 = scmp.eq.s32.totalorder %s27, 0
      %p180 = por %p178, %p179
      %s181 = ssub.s32 %s21, %s28
      %p182 = scmp.eq.s32.totalorder %s181, 0
      %s184 = sadd.s32 %s183, 1
      %s185 = scalar_select %p182, %s183, %s184
      %p188 = pneg %p182
      %p189 = scmp.eq.s32.totalorder %s21, 1
      %p190 = por %p188, %p189
      %p191 = scmp.ne.s32.totalorder %s183, %s186
      %p192 = scmp.eq.s32.totalorder %s21, 0
      %p193 = por %p191, %p192
      %p194 = scmp.ne.s32.totalorder %s183, %s186
      %p195 = scmp.eq.s32.totalorder %s26, 1
      %p196 = por %p194, %p195
      %p197 = scmp.ne.s32.totalorder %s186, %s187
      %p198 = scmp.eq.s32.totalorder %s26, 0
      %p199 = por %p197, %p198
      %p200 = scmp.ne.s32.totalorder %s186, %s187
      %p201 = scmp.eq.s32.totalorder %s27, 1
      %p202 = por %p200, %p201
      %p204 = scmp.ne.s32.totalorder %s187, %s203
      %p205 = scmp.eq.s32.totalorder %s27, 0
      %p206 = por %p204, %p205
      %p207 = scmp.le.s32.totalorder 1, %s21
      %p208 = scmp.lt.s32.totalorder %s21, 3
      %p209 = pnand %p207, %p208
      %p210 = pneg %p209
      // Predicated region
      $region9: #{tpu_custom_call.1} parent=5 // pred_check
        _
      $region10: #{tpu_custom_call.1} parent=5 // pred_check_branch
        %212 = sbr.rel (%p209) target = $region12
      $region11: #{tpu_custom_call.1} parent=5 // pred_region
        %s213 = ssub.s32 %s21, 1
        // Predicated region
        $region13: #{tpu_custom_call.1} parent=11 // pred_check
          %p214 = pneg %p68
        $region14: #{tpu_custom_call.1} parent=11 // pred_check_branch
          %216 = sbr.rel (%p214) target = $region16
        $region15: #{tpu_custom_call.1} parent=11 // pred_region
          %s218 = ssub.s32 1024, 1024
          %219 = vsyncadd [#allocation6], %s218
          %s220 = sshll.u32 [#allocation5], 4
          %s221 = int_to_ptr.vmem [resolvable:$true] %s220
          %226 = dma.hbm_to_vmem [thread:$0]  %s1, 1024, %s221, [#allocation6], 64, 64, 4
        $region16: #{tpu_custom_call.1} parent=11 // pred_fallthru
          _
        // Predicated region
        $region17: #{tpu_custom_call.1} parent=11 // pred_check
          %p227 = pneg %p89
        $region18: #{tpu_custom_call.1} parent=11 // pred_check_branch
          %229 = sbr.rel (%p227) target = $region20
        $region19: #{tpu_custom_call.1} parent=11 // pred_region
          _
        $region20: #{tpu_custom_call.1} parent=11 // pred_fallthru
          _
        // Predicated region
        $region21: #{tpu_custom_call.1} parent=11 // pred_check
          %p230 = pneg %p110
        $region22: #{tpu_custom_call.1} parent=11 // pred_check_branch
          %232 = sbr.rel (%p230) target = $region24
        $region23: #{tpu_custom_call.1} parent=11 // pred_region
          %s234 = ssub.s32 1024, 1024
          %235 = vsyncadd [#allocation6], %s234
          %s236 = sshll.u32 [#allocation7], 4
          %s237 = int_to_ptr.vmem [resolvable:$true] %s236
          %242 = dma.hbm_to_vmem [thread:$0]  %s3, 1024, %s237, [#allocation6], 64, 64, 4
        $region24: #{tpu_custom_call.1} parent=11 // pred_fallthru
          _
        // Predicated region
        $region25: #{tpu_custom_call.1} parent=11 // pred_check
          %p243 = pneg %p131
        $region26: #{tpu_custom_call.1} parent=11 // pred_check_branch
          %245 = sbr.rel (%p243) target = $region28
        $region27: #{tpu_custom_call.1} parent=11 // pred_region
          _
        $region28: #{tpu_custom_call.1} parent=11 // pred_fallthru
          _
        // Predicated region
        $region29: #{tpu_custom_call.1} parent=11 // pred_check
          %p246 = pneg %p152
        $region30: #{tpu_custom_call.1} parent=11 // pred_check_branch
          %248 = sbr.rel (%p246) target = $region32
        $region31: #{tpu_custom_call.1} parent=11 // pred_region
          %s250 = ssub.s32 1024, 1024
          %251 = vsyncadd [#allocation9], %s250
          %s252 = sshll.u32 [#allocation8], 4
          %s253 = int_to_ptr.vmem [resolvable:$true] %s252
          %258 = dma.hbm_to_vmem [thread:$0]  %s5, 1024, %s253, [#allocation9], 64, 64, 4
        $region32: #{tpu_custom_call.1} parent=11 // pred_fallthru
          _
        // Predicated region
        $region33: #{tpu_custom_call.1} parent=11 // pred_check
          %p259 = pneg %p173
        $region34: #{tpu_custom_call.1} parent=11 // pred_check_branch
          %261 = sbr.rel (%p259) target = $region36
        $region35: #{tpu_custom_call.1} parent=11 // pred_region
          _
        $region36: #{tpu_custom_call.1} parent=11 // pred_fallthru
          _
      $region12: #{tpu_custom_call.1} parent=5 // pred_fallthru
        _
      %p262 = scmp.lt.s32.totalorder %s21, 2
      // Predicated region
      $region37: #{tpu_custom_call.1} parent=5 // pred_check
        %p263 = pneg %p262
      $region38: #{tpu_custom_call.1} parent=5 // pred_check_branch
        %265 = sbr.rel (%p263) target = $region40
      $region39: #{tpu_custom_call.1} parent=5 // pred_region
        // Predicated region
        $region41: #{tpu_custom_call.1} parent=39 // pred_check
          %p266 = pneg %p41
        $region42: #{tpu_custom_call.1} parent=39 // pred_check_branch
          %268 = sbr.rel (%p266) target = $region44
        $region43: #{tpu_custom_call.1} parent=39 // pred_region
          %s269 = sand.u32 %s31, 1
          %s270 = scalar_lea.sflag [#allocation3], %s269
          %s271 = sand.u32 %s31, 1
          %s272 = smul.addr %s271, 64
          %s273 = scalar_lea.vmem [#allocation2], %s272
          %s274 = smul.u32 16, %s21
          %s276 = ssub.s32 1024, 1024
          %277 = vsyncadd %s270, %s276
          %s278 = smul.addr %s274, 64
          %s279 = scalar_lea.hbm %s0, %s278
          %s280 = sshll.u32 %s273, 4
          %s281 = int_to_ptr.vmem [resolvable:$true] %s280
          %286 = dma.hbm_to_vmem [thread:$0]  %s279, 1024, %s281, %s270, 64, 64, 4
        $region44: #{tpu_custom_call.1} parent=39 // pred_fallthru
          _
      $region40: #{tpu_custom_call.1} parent=5 // pred_fallthru
        _
      %p287 = scmp.le.s32.totalorder 1, %s21
      %p288 = scmp.lt.s32.totalorder %s21, 3
      %p289 = pnand %p287, %p288
      %p290 = pneg %p289
      // Predicated region
      $region45: #{tpu_custom_call.1} parent=5 // pred_check
        _
      $region46: #{tpu_custom_call.1} parent=5 // pred_check_branch
        %292 = sbr.rel (%p289) target = $region48
      $region47: #{tpu_custom_call.1} parent=5 // pred_region
        %s293 = ssub.s32 %s21, 1
        %s294 = sand.u32 %s34, 1
        %s295 = scalar_lea.sflag [#allocation3], %s294
        %s296 = sand.u32 %s34, 1
        %s297 = smul.addr %s296, 64
        %s298 = scalar_lea.vmem [#allocation2], %s297
        // Predicated region
        $region49: #{tpu_custom_call.1} parent=47 // pred_check
          %p299 = pneg %p47
        $region50: #{tpu_custom_call.1} parent=47 // pred_check_branch
          %301 = sbr.rel (%p299) target = $region52
        $region51: #{tpu_custom_call.1} parent=47 // pred_region
          %302 = dma.done %s295, 1024
        $region52: #{tpu_custom_call.1} parent=47 // pred_fallthru
          _
        // Predicated region
        $region53: #{tpu_custom_call.1} parent=47 // pred_check
          %p303 = pneg %p68
        $region54: #{tpu_custom_call.1} parent=47 // pred_check_branch
          %305 = sbr.rel (%p303) target = $region56
        $region55: #{tpu_custom_call.1} parent=47 // pred_region
          %306 = dma.done [#allocation6], 1024
        $region56: #{tpu_custom_call.1} parent=47 // pred_fallthru
          _
        // Predicated region
        $region57: #{tpu_custom_call.1} parent=47 // pred_check
          %p307 = pneg %p110
        $region58: #{tpu_custom_call.1} parent=47 // pred_check_branch
          %309 = sbr.rel (%p307) target = $region60
        $region59: #{tpu_custom_call.1} parent=47 // pred_region
          %310 = dma.done [#allocation6], 1024
        $region60: #{tpu_custom_call.1} parent=47 // pred_fallthru
          _
        // Predicated region
        $region61: #{tpu_custom_call.1} parent=47 // pred_check
          %p311 = pneg %p152
        $region62: #{tpu_custom_call.1} parent=47 // pred_check_branch
          %313 = sbr.rel (%p311) target = $region64
        $region63: #{tpu_custom_call.1} parent=47 // pred_region
          %314 = dma.done [#allocation9], 1024
        $region64: #{tpu_custom_call.1} parent=47 // pred_fallthru
          _
        %s315 = sand.u32 %s34, 1
        %s316 = scalar_lea.sflag [#allocation3], %s315
        %s317 = sand.u32 %s34, 1
        %s318 = smul.addr %s317, 64
        %s319 = scalar_lea.vmem [#allocation2], %s318
        %p320 = pneg %p47
        %p321 = pneg %p44
        %p322 = pneg %p68
        %p323 = pneg %p65
        %p324 = pneg %p89
        %p325 = pneg %p86
        %p326 = pneg %p110
        %p327 = pneg %p107
        %p328 = pneg %p131
        %p329 = pneg %p128
        %p330 = pneg %p152
        %p331 = pneg %p149
        %p332 = pneg %p173
        %p333 = pneg %p170
        %p334 = pneg %p199
        %p335 = pneg %p196
        %s336 = sand.u32 %s186, 1
        %s337 = scalar_lea.sflag [#allocation4], %s336
        %s338 = sand.u32 %s186, 1
        %s339 = smul.addr %s338, 128
        %s340 = scalar_lea.vmem [#allocation10], %s339
        %s341 = smul.u32 16, %s26
        %s342 = smul.u32 16, %s26
        %v344 = vld [vmem:[%s298] sm:$0xf]
        %v345 = vld [vmem:[%s298 + $0x4] sm:$0xf]
        %v346 = vld [vmem:[%s298 + $0x8] sm:$0xf]
        %v347 = vld [vmem:[%s298 + $0xc] sm:$0xf]
        %v348 = vld [vmem:[%s298 + $0x10] sm:$0xf]
        %v349 = vld [vmem:[%s298 + $0x14] sm:$0xf]
        %v350 = vld [vmem:[%s298 + $0x18] sm:$0xf]
        %v351 = vld [vmem:[%s298 + $0x1c] sm:$0xf]
        %v352 = vld [vmem:[%s298 + $0x20] sm:$0xf]
        %v353 = vld [vmem:[%s298 + $0x24] sm:$0xf]
        %v354 = vld [vmem:[%s298 + $0x28] sm:$0xf]
        %v355 = vld [vmem:[%s298 + $0x2c] sm:$0xf]
        %v356 = vld [vmem:[%s298 + $0x30] sm:$0xf]
        %v357 = vld [vmem:[%s298 + $0x34] sm:$0xf]
        %v358 = vld [vmem:[%s298 + $0x38] sm:$0xf]
        %v359 = vld [vmem:[%s298 + $0x3c] sm:$0xf]
        %v360 = vld [vmem:[#allocation5] sm:$0xf]
        %v361 = vld [vmem:[#allocation5 + $0x4] sm:$0xf]
        %v362 = vld [vmem:[#allocation5 + $0x8] sm:$0xf]
        %v363 = vld [vmem:[#allocation5 + $0xc] sm:$0xf]
        %v364 = vld [vmem:[#allocation5 + $0x10] sm:$0xf]
        %v365 = vld [vmem:[#allocation5 + $0x14] sm:$0xf]
        %v366 = vld [vmem:[#allocation5 + $0x18] sm:$0xf]
        %v367 = vld [vmem:[#allocation5 + $0x1c] sm:$0xf]
        %v368 = vld [vmem:[#allocation5 + $0x20] sm:$0xf]
        %v369 = vld [vmem:[#allocation5 + $0x24] sm:$0xf]
        %v370 = vld [vmem:[#allocation5 + $0x28] sm:$0xf]
        %v371 = vld [vmem:[#allocation5 + $0x2c] sm:$0xf]
        %v372 = vld [vmem:[#allocation5 + $0x30] sm:$0xf]
        %v373 = vld [vmem:[#allocation5 + $0x34] sm:$0xf]
        %v374 = vld [vmem:[#allocation5 + $0x38] sm:$0xf]
        %v375 = vld [vmem:[#allocation5 + $0x3c] sm:$0xf]
        %v376 = vld [vmem:[%s2] sm:$0x1]
        %v378 = vlaneseq
        %v379 = vshrl.u32 %v378, 7
        %v380 = vsub.s32 0, %v379
        %v381 = vrot.slane %v376, %v380
        %v399 = vunpack.c.l.b16 %v344
        %v400 = vunpack.c.l.b16 %v345
        %v401 = vunpack.c.l.b16 %v346
        %v402 = vunpack.c.l.b16 %v347
        %v403 = vunpack.c.l.b16 %v348
        %v404 = vunpack.c.l.b16 %v349
        %v405 = vunpack.c.l.b16 %v350
        %v406 = vunpack.c.l.b16 %v351
        %v407 = vunpack.c.l.b16 %v352
        %v408 = vunpack.c.l.b16 %v353
        %v409 = vunpack.c.l.b16 %v354
        %v410 = vunpack.c.l.b16 %v355
        %v411 = vunpack.c.l.b16 %v356
        %v412 = vunpack.c.l.b16 %v357
        %v413 = vunpack.c.l.b16 %v358
        %v414 = vunpack.c.l.b16 %v359
        %v415 = vpack.c.b16 %v400, %v399
        %v416 = vpack.c.b16 %v402, %v401
        %v417 = vpack.c.b16 %v404, %v403
        %v418 = vpack.c.b16 %v406, %v405
        %v419 = vpack.c.b16 %v408, %v407
        %v420 = vpack.c.b16 %v410, %v409
        %v421 = vpack.c.b16 %v412, %v411
        %v422 = vpack.c.b16 %v414, %v413
        %v447 = vunpack.c.l.b16 %v360
        %v448 = vunpack.c.l.b16 %v361
        %v449 = vunpack.c.l.b16 %v362
        %v450 = vunpack.c.l.b16 %v363
        %v451 = vunpack.c.l.b16 %v364
        %v452 = vunpack.c.l.b16 %v365
        %v453 = vunpack.c.l.b16 %v366
        %v454 = vunpack.c.l.b16 %v367
        %v455 = vunpack.c.l.b16 %v368
        %v456 = vunpack.c.l.b16 %v369
        %v457 = vunpack.c.l.b16 %v370
        %v458 = vunpack.c.l.b16 %v371
        %v459 = vunpack.c.l.b16 %v372
        %v460 = vunpack.c.l.b16 %v373
        %v461 = vunpack.c.l.b16 %v374
        %v462 = vunpack.c.l.b16 %v375
        %v463 = vpack.c.b16 %v448, %v447
        %v464 = vpack.c.b16 %v450, %v449
        %v465 = vpack.c.b16 %v452, %v451
        %v466 = vpack.c.b16 %v454, %v453
        %v467 = vpack.c.b16 %v456, %v455
        %v468 = vpack.c.b16 %v458, %v457
        %v469 = vpack.c.b16 %v460, %v459
        %v470 = vpack.c.b16 %v462, %v461
        %479 = vmatprep.subr.bf16.mxu0 0
        %480 = vmatpush1.bf16.msra.mxu0 %v470
        %481 = vmatprep.subr.bf16.mxu0 0
        %482 = vmatpush1.bf16.msra.mxu0 %v469
        %483 = vmatprep.subr.bf16.mxu0 0
        %484 = vmatpush1.bf16.msra.mxu0 %v468
        %485 = vmatprep.subr.bf16.mxu0 0
        %486 = vmatpush1.bf16.msra.mxu0 %v467
        %487 = vmatprep.subr.bf16.mxu0 0
        %488 = vmatpush1.bf16.msra.mxu0 %v466
        %489 = vmatprep.subr.bf16.mxu0 0
        %490 = vmatpush1.bf16.msra.mxu0 %v465
        %491 = vmatprep.subr.bf16.mxu0 0
        %492 = vmatpush1.bf16.msra.mxu0 %v464
        %493 = vmatprep.subr.bf16.mxu0 0
        %494 = vmatpush1.bf16.msra.mxu0 %v463
        %495 = vmatprep.subr.bf16.mxu0 0
        %496 = vmatpush2.bf16.msra.mxu0 0
        %497 = vmatprep.subr.bf16.mxu0 0
        %498 = vmatpush2.bf16.msra.mxu0 0
        %499 = vmatprep.subr.bf16.mxu0 0
        %500 = vmatpush2.bf16.msra.mxu0 0
        %501 = vmatprep.subr.bf16.mxu0 0
        %502 = vmatpush2.bf16.msra.mxu0 0
        %503 = vmatprep.subr.bf16.mxu0 0
        %504 = vmatpush2.bf16.msra.mxu0 0
        %505 = vmatprep.subr.bf16.mxu0 0
        %506 = vmatpush2.bf16.msra.mxu0 0
        %507 = vmatprep.subr.bf16.mxu0 0
        %508 = vmatpush2.bf16.msra.mxu0 0
        %509 = vmatprep.subr.bf16.mxu0 0
        %510 = vmatpush2.bf16.msra.mxu0 0
        %511 = vmatprep.mubr.bf16.mxu0 0
        %512 = vmatmul.mubr.bf16.gmra.mxu0 %v415
        %v513 = vpop.f32.mrf.mxu0
        %v514 = vadd.f32 %v381, %v513
        %v515 = vpop.f32.mrf.mxu0
        %v516 = vpop.f32.mrf.mxu0
        %v517 = vadd.f32 %v381, %v516
        %v518 = vpop.f32.mrf.mxu0
        %519 = vmatprep.mubr.bf16.mxu0 0
        %520 = vmatmul.mubr.bf16.gmra.mxu0 %v416
        %v521 = vpop.f32.mrf.mxu0
        %v522 = vadd.f32 %v381, %v521
        %v523 = vpop.f32.mrf.mxu0
        %v524 = vpop.f32.mrf.mxu0
        %v525 = vadd.f32 %v381, %v524
        %v526 = vpop.f32.mrf.mxu0
        %527 = vmatprep.mubr.bf16.mxu0 0
        %528 = vmatmul.mubr.bf16.gmra.mxu0 %v417
        %v529 = vpop.f32.mrf.mxu0
        %v530 = vadd.f32 %v381, %v529
        %v531 = vpop.f32.mrf.mxu0
        %v532 = vpop.f32.mrf.mxu0
        %v533 = vadd.f32 %v381, %v532
        %v534 = vpop.f32.mrf.mxu0
        %535 = vmatprep.mubr.bf16.mxu0 0
        %536 = vmatmul.mubr.bf16.gmra.mxu0 %v418
        %v537 = vpop.f32.mrf.mxu0
        %v538 = vadd.f32 %v381, %v537
        %v539 = vpop.f32.mrf.mxu0
        %v540 = vpop.f32.mrf.mxu0
        %v541 = vadd.f32 %v381, %v540
        %v542 = vpop.f32.mrf.mxu0
        %543 = vmatprep.mubr.bf16.mxu0 0
        %544 = vmatmul.mubr.bf16.gmra.mxu0 %v419
        %v545 = vpop.f32.mrf.mxu0
        %v546 = vadd.f32 %v381, %v545
        %v547 = vpop.f32.mrf.mxu0
        %v548 = vpop.f32.mrf.mxu0
        %v549 = vadd.f32 %v381, %v548
        %v550 = vpop.f32.mrf.mxu0
        %551 = vmatprep.mubr.bf16.mxu0 0
        %552 = vmatmul.mubr.bf16.gmra.mxu0 %v420
        %v553 = vpop.f32.mrf.mxu0
        %v554 = vadd.f32 %v381, %v553
        %v555 = vpop.f32.mrf.mxu0
        %v556 = vpop.f32.mrf.mxu0
        %v557 = vadd.f32 %v381, %v556
        %v558 = vpop.f32.mrf.mxu0
        %559 = vmatprep.mubr.bf16.mxu0 0
        %560 = vmatmul.mubr.bf16.gmra.mxu0 %v421
        %v561 = vpop.f32.mrf.mxu0
        %v562 = vadd.f32 %v381, %v561
        %v563 = vpop.f32.mrf.mxu0
        %v564 = vpop.f32.mrf.mxu0
        %v565 = vadd.f32 %v381, %v564
        %v566 = vpop.f32.mrf.mxu0
        %567 = vmatprep.mubr.bf16.mxu0 0
        %568 = vmatmul.mubr.bf16.gmra.mxu0 %v422
        %v569 = vpop.f32.mrf.mxu0
        %v570 = vadd.f32 %v381, %v569
        %v571 = vpop.f32.mrf.mxu0
        %v572 = vpop.f32.mrf.mxu0
        %v573 = vadd.f32 %v381, %v572
        %v574 = vpop.f32.mrf.mxu0
        %575 = vdwg.mxu0
        %v576 = vmul.f32 %v514, 0.5
        %v577 = vmul.f32 %v517, 0.5
        %v578 = vmul.f32 %v522, 0.5
        %v579 = vmul.f32 %v525, 0.5
        %v580 = vmul.f32 %v530, 0.5
        %v581 = vmul.f32 %v533, 0.5
        %v582 = vmul.f32 %v538, 0.5
        %v583 = vmul.f32 %v541, 0.5
        %v584 = vmul.f32 %v546, 0.5
        %v585 = vmul.f32 %v549, 0.5
        %v586 = vmul.f32 %v554, 0.5
        %v587 = vmul.f32 %v557, 0.5
        %v588 = vmul.f32 %v562, 0.5
        %v589 = vmul.f32 %v565, 0.5
        %v590 = vmul.f32 %v570, 0.5
        %v591 = vmul.f32 %v573, 0.5
        %v592 = vrcp.pop 1.4142135
        %v593 = vmul.f32 %v514, %v592
        %v594 = vmul.f32 %v517, %v592
        %v595 = vmul.f32 %v522, %v592
        %v596 = vmul.f32 %v525, %v592
        %v597 = vmul.f32 %v530, %v592
        %v598 = vmul.f32 %v533, %v592
        %v599 = vmul.f32 %v538, %v592
        %v600 = vmul.f32 %v541, %v592
        %v601 = vmul.f32 %v546, %v592
        %v602 = vmul.f32 %v549, %v592
        %v603 = vmul.f32 %v554, %v592
        %v604 = vmul.f32 %v557, %v592
        %v605 = vmul.f32 %v562, %v592
        %v606 = vmul.f32 %v565, %v592
        %v607 = vmul.f32 %v570, %v592
        %v608 = vmul.f32 %v573, %v592
        %v609 = verf.f32.pop %v593
        %v610 = verf.f32.pop %v594
        %v611 = verf.f32.pop %v595
        %v612 = verf.f32.pop %v596
        %v613 = verf.f32.pop %v597
        %v614 = verf.f32.pop %v598
        %v615 = verf.f32.pop %v599
        %v616 = verf.f32.pop %v600
        %v617 = verf.f32.pop %v601
        %v618 = verf.f32.pop %v602
        %v619 = verf.f32.pop %v603
        %v620 = verf.f32.pop %v604
        %v621 = verf.f32.pop %v605
        %v622 = verf.f32.pop %v606
        %v623 = verf.f32.pop %v607
        %v624 = verf.f32.pop %v608
        %v625 = vadd.f32 %v609, 1.0
        %v626 = vadd.f32 %v610, 1.0
        %v627 = vadd.f32 %v611, 1.0
        %v628 = vadd.f32 %v612, 1.0
        %v629 = vadd.f32 %v613, 1.0
        %v630 = vadd.f32 %v614, 1.0
        %v631 = vadd.f32 %v615, 1.0
        %v632 = vadd.f32 %v616, 1.0
        %v633 = vadd.f32 %v617, 1.0
        %v634 = vadd.f32 %v618, 1.0
        %v635 = vadd.f32 %v619, 1.0
        %v636 = vadd.f32 %v620, 1.0
        %v637 = vadd.f32 %v621, 1.0
        %v638 = vadd.f32 %v622, 1.0
        %v639 = vadd.f32 %v623, 1.0
        %v640 = vadd.f32 %v624, 1.0
        %v641 = vmul.f32 %v576, %v625
        %v642 = vmul.f32 %v577, %v626
        %v643 = vmul.f32 %v578, %v627
        %v644 = vmul.f32 %v579, %v628
        %v645 = vmul.f32 %v580, %v629
        %v646 = vmul.f32 %v581, %v630
        %v647 = vmul.f32 %v582, %v631
        %v648 = vmul.f32 %v583, %v632
        %v649 = vmul.f32 %v584, %v633
        %v650 = vmul.f32 %v585, %v634
        %v651 = vmul.f32 %v586, %v635
        %v652 = vmul.f32 %v587, %v636
        %v653 = vmul.f32 %v588, %v637
        %v654 = vmul.f32 %v589, %v638
        %v655 = vmul.f32 %v590, %v639
        %v656 = vmul.f32 %v591, %v640
        %v657 = vpack.c.bf16 %v642, %v641
        %v658 = vpack.c.bf16 %v644, %v643
        %v659 = vpack.c.bf16 %v646, %v645
        %v660 = vpack.c.bf16 %v648, %v647
        %v661 = vpack.c.bf16 %v650, %v649
        %v662 = vpack.c.bf16 %v652, %v651
        %v663 = vpack.c.bf16 %v654, %v653
        %v664 = vpack.c.bf16 %v656, %v655
        %v665 = vld [vmem:[#allocation7] sm:$0xf]
        %v666 = vld [vmem:[#allocation7 + $0x4] sm:$0xf]
        %v667 = vld [vmem:[#allocation7 + $0x8] sm:$0xf]
        %v668 = vld [vmem:[#allocation7 + $0xc] sm:$0xf]
        %v669 = vld [vmem:[#allocation7 + $0x10] sm:$0xf]
        %v670 = vld [vmem:[#allocation7 + $0x14] sm:$0xf]
        %v671 = vld [vmem:[#allocation7 + $0x18] sm:$0xf]
        %v672 = vld [vmem:[#allocation7 + $0x1c] sm:$0xf]
        %v673 = vld [vmem:[#allocation7 + $0x20] sm:$0xf]
        %v674 = vld [vmem:[#allocation7 + $0x24] sm:$0xf]
        %v675 = vld [vmem:[#allocation7 + $0x28] sm:$0xf]
        %v676 = vld [vmem:[#allocation7 + $0x2c] sm:$0xf]
        %v677 = vld [vmem:[#allocation7 + $0x30] sm:$0xf]
        %v678 = vld [vmem:[#allocation7 + $0x34] sm:$0xf]
        %v679 = vld [vmem:[#allocation7 + $0x38] sm:$0xf]
        %v680 = vld [vmem:[#allocation7 + $0x3c] sm:$0xf]
        %v681 = vld [vmem:[%s4] sm:$0x1]
        %v683 = vlaneseq
        %v684 = vshrl.u32 %v683, 7
        %v685 = vsub.s32 0, %v684
        %v686 = vrot.slane %v681, %v685
        %v704 = vunpack.c.l.b16 %v665
        %v705 = vunpack.c.l.b16 %v666
        %v706 = vunpack.c.l.b16 %v667
        %v707 = vunpack.c.l.b16 %v668
        %v708 = vunpack.c.l.b16 %v669
        %v709 = vunpack.c.l.b16 %v670
        %v710 = vunpack.c.l.b16 %v671
        %v711 = vunpack.c.l.b16 %v672
        %v712 = vunpack.c.l.b16 %v673
        %v713 = vunpack.c.l.b16 %v674
        %v714 = vunpack.c.l.b16 %v675
        %v715 = vunpack.c.l.b16 %v676
        %v716 = vunpack.c.l.b16 %v677
        %v717 = vunpack.c.l.b16 %v678
        %v718 = vunpack.c.l.b16 %v679
        %v719 = vunpack.c.l.b16 %v680
        %v720 = vpack.c.b16 %v705, %v704
        %v721 = vpack.c.b16 %v707, %v706
        %v722 = vpack.c.b16 %v709, %v708
        %v723 = vpack.c.b16 %v711, %v710
        %v724 = vpack.c.b16 %v713, %v712
        %v725 = vpack.c.b16 %v715, %v714
        %v726 = vpack.c.b16 %v717, %v716
        %v727 = vpack.c.b16 %v719, %v718
        %736 = vmatprep.subr.bf16.mxu0 0
        %737 = vmatpush1.bf16.msra.mxu0 %v727
        %738 = vmatprep.subr.bf16.mxu0 0
        %739 = vmatpush1.bf16.msra.mxu0 %v726
        %740 = vmatprep.subr.bf16.mxu0 0
        %741 = vmatpush1.bf16.msra.mxu0 %v725
        %742 = vmatprep.subr.bf16.mxu0 0
        %743 = vmatpush1.bf16.msra.mxu0 %v724
        %744 = vmatprep.subr.bf16.mxu0 0
        %745 = vmatpush1.bf16.msra.mxu0 %v723
        %746 = vmatprep.subr.bf16.mxu0 0
        %747 = vmatpush1.bf16.msra.mxu0 %v722
        %748 = vmatprep.subr.bf16.mxu0 0
        %749 = vmatpush1.bf16.msra.mxu0 %v721
        %750 = vmatprep.subr.bf16.mxu0 0
        %751 = vmatpush1.bf16.msra.mxu0 %v720
        %752 = vmatprep.subr.bf16.mxu0 0
        %753 = vmatpush2.bf16.msra.mxu0 0
        %754 = vmatprep.subr.bf16.mxu0 0
        %755 = vmatpush2.bf16.msra.mxu0 0
        %756 = vmatprep.subr.bf16.mxu0 0
        %757 = vmatpush2.bf16.msra.mxu0 0
        %758 = vmatprep.subr.bf16.mxu0 0
        %759 = vmatpush2.bf16.msra.mxu0 0
        %760 = vmatprep.subr.bf16.mxu0 0
        %761 = vmatpush2.bf16.msra.mxu0 0
        %762 = vmatprep.subr.bf16.mxu0 0
        %763 = vmatpush2.bf16.msra.mxu0 0
        %764 = vmatprep.subr.bf16.mxu0 0
        %765 = vmatpush2.bf16.msra.mxu0 0
        %766 = vmatprep.subr.bf16.mxu0 0
        %767 = vmatpush2.bf16.msra.mxu0 0
        %768 = vmatprep.mubr.bf16.mxu0 0
        %769 = vmatmul.mubr.bf16.gmra.mxu0 %v657
        %v770 = vpop.f32.mrf.mxu0
        %v771 = vadd.f32 %v686, %v770
        %v772 = vpop.f32.mrf.mxu0
        %v773 = vpop.f32.mrf.mxu0
        %v774 = vadd.f32 %v686, %v773
        %v775 = vpop.f32.mrf.mxu0
        %776 = vmatprep.mubr.bf16.mxu0 0
        %777 = vmatmul.mubr.bf16.gmra.mxu0 %v658
        %v778 = vpop.f32.mrf.mxu0
        %v779 = vadd.f32 %v686, %v778
        %v780 = vpop.f32.mrf.mxu0
        %v781 = vpop.f32.mrf.mxu0
        %v782 = vadd.f32 %v686, %v781
        %v783 = vpop.f32.mrf.mxu0
        %784 = vmatprep.mubr.bf16.mxu0 0
        %785 = vmatmul.mubr.bf16.gmra.mxu0 %v659
        %v786 = vpop.f32.mrf.mxu0
        %v787 = vadd.f32 %v686, %v786
        %v788 = vpop.f32.mrf.mxu0
        %v789 = vpop.f32.mrf.mxu0
        %v790 = vadd.f32 %v686, %v789
        %v791 = vpop.f32.mrf.mxu0
        %792 = vmatprep.mubr.bf16.mxu0 0
        %793 = vmatmul.mubr.bf16.gmra.mxu0 %v660
        %v794 = vpop.f32.mrf.mxu0
        %v795 = vadd.f32 %v686, %v794
        %v796 = vpop.f32.mrf.mxu0
        %v797 = vpop.f32.mrf.mxu0
        %v798 = vadd.f32 %v686, %v797
        %v799 = vpop.f32.mrf.mxu0
        %800 = vmatprep.mubr.bf16.mxu0 0
        %801 = vmatmul.mubr.bf16.gmra.mxu0 %v661
        %v802 = vpop.f32.mrf.mxu0
        %v803 = vadd.f32 %v686, %v802
        %v804 = vpop.f32.mrf.mxu0
        %v805 = vpop.f32.mrf.mxu0
        %v806 = vadd.f32 %v686, %v805
        %v807 = vpop.f32.mrf.mxu0
        %808 = vmatprep.mubr.bf16.mxu0 0
        %809 = vmatmul.mubr.bf16.gmra.mxu0 %v662
        %v810 = vpop.f32.mrf.mxu0
        %v811 = vadd.f32 %v686, %v810
        %v812 = vpop.f32.mrf.mxu0
        %v813 = vpop.f32.mrf.mxu0
        %v814 = vadd.f32 %v686, %v813
        %v815 = vpop.f32.mrf.mxu0
        %816 = vmatprep.mubr.bf16.mxu0 0
        %817 = vmatmul.mubr.bf16.gmra.mxu0 %v663
        %v818 = vpop.f32.mrf.mxu0
        %v819 = vadd.f32 %v686, %v818
        %v820 = vpop.f32.mrf.mxu0
        %v821 = vpop.f32.mrf.mxu0
        %v822 = vadd.f32 %v686, %v821
        %v823 = vpop.f32.mrf.mxu0
        %824 = vmatprep.mubr.bf16.mxu0 0
        %825 = vmatmul.mubr.bf16.gmra.mxu0 %v664
        %v826 = vpop.f32.mrf.mxu0
        %v827 = vadd.f32 %v686, %v826
        %v828 = vpop.f32.mrf.mxu0
        %v829 = vpop.f32.mrf.mxu0
        %v830 = vadd.f32 %v686, %v829
        %v831 = vpop.f32.mrf.mxu0
        %832 = vdwg.mxu0
        %v833 = vmul.f32 %v771, 0.5
        %v834 = vmul.f32 %v774, 0.5
        %v835 = vmul.f32 %v779, 0.5
        %v836 = vmul.f32 %v782, 0.5
        %v837 = vmul.f32 %v787, 0.5
        %v838 = vmul.f32 %v790, 0.5
        %v839 = vmul.f32 %v795, 0.5
        %v840 = vmul.f32 %v798, 0.5
        %v841 = vmul.f32 %v803, 0.5
        %v842 = vmul.f32 %v806, 0.5
        %v843 = vmul.f32 %v811, 0.5
        %v844 = vmul.f32 %v814, 0.5
        %v845 = vmul.f32 %v819, 0.5
        %v846 = vmul.f32 %v822, 0.5
        %v847 = vmul.f32 %v827, 0.5
        %v848 = vmul.f32 %v830, 0.5
        %v849 = vmul.f32 %v771, %v592
        %v850 = vmul.f32 %v774, %v592
        %v851 = vmul.f32 %v779, %v592
        %v852 = vmul.f32 %v782, %v592
        %v853 = vmul.f32 %v787, %v592
        %v854 = vmul.f32 %v790, %v592
        %v855 = vmul.f32 %v795, %v592
        %v856 = vmul.f32 %v798, %v592
        %v857 = vmul.f32 %v803, %v592
        %v858 = vmul.f32 %v806, %v592
        %v859 = vmul.f32 %v811, %v592
        %v860 = vmul.f32 %v814, %v592
        %v861 = vmul.f32 %v819, %v592
        %v862 = vmul.f32 %v822, %v592
        %v863 = vmul.f32 %v827, %v592
        %v864 = vmul.f32 %v830, %v592
        %v865 = verf.f32.pop %v849
        %v866 = verf.f32.pop %v850
        %v867 = verf.f32.pop %v851
        %v868 = verf.f32.pop %v852
        %v869 = verf.f32.pop %v853
        %v870 = verf.f32.pop %v854
        %v871 = verf.f32.pop %v855
        %v872 = verf.f32.pop %v856
        %v873 = verf.f32.pop %v857
        %v874 = verf.f32.pop %v858
        %v875 = verf.f32.pop %v859
        %v876 = verf.f32.pop %v860
        %v877 = verf.f32.pop %v861
        %v878 = verf.f32.pop %v862
        %v879 = verf.f32.pop %v863
        %v880 = verf.f32.pop %v864
        %v881 = vadd.f32 %v865, 1.0
        %v882 = vadd.f32 %v866, 1.0
        %v883 = vadd.f32 %v867, 1.0
        %v884 = vadd.f32 %v868, 1.0
        %v885 = vadd.f32 %v869, 1.0
        %v886 = vadd.f32 %v870, 1.0
        %v887 = vadd.f32 %v871, 1.0
        %v888 = vadd.f32 %v872, 1.0
        %v889 = vadd.f32 %v873, 1.0
        %v890 = vadd.f32 %v874, 1.0
        %v891 = vadd.f32 %v875, 1.0
        %v892 = vadd.f32 %v876, 1.0
        %v893 = vadd.f32 %v877, 1.0
        %v894 = vadd.f32 %v878, 1.0
        %v895 = vadd.f32 %v879, 1.0
        %v896 = vadd.f32 %v880, 1.0
        %v897 = vmul.f32 %v833, %v881
        %v898 = vmul.f32 %v834, %v882
        %v899 = vmul.f32 %v835, %v883
        %v900 = vmul.f32 %v836, %v884
        %v901 = vmul.f32 %v837, %v885
        %v902 = vmul.f32 %v838, %v886
        %v903 = vmul.f32 %v839, %v887
        %v904 = vmul.f32 %v840, %v888
        %v905 = vmul.f32 %v841, %v889
        %v906 = vmul.f32 %v842, %v890
        %v907 = vmul.f32 %v843, %v891
        %v908 = vmul.f32 %v844, %v892
        %v909 = vmul.f32 %v845, %v893
        %v910 = vmul.f32 %v846, %v894
        %v911 = vmul.f32 %v847, %v895
        %v912 = vmul.f32 %v848, %v896
        %v913 = vpack.c.bf16 %v898, %v897
        %v914 = vpack.c.bf16 %v900, %v899
        %v915 = vpack.c.bf16 %v902, %v901
        %v916 = vpack.c.bf16 %v904, %v903
        %v917 = vpack.c.bf16 %v906, %v905
        %v918 = vpack.c.bf16 %v908, %v907
        %v919 = vpack.c.bf16 %v910, %v909
        %v920 = vpack.c.bf16 %v912, %v911
        %v921 = vld [vmem:[#allocation8] sm:$0xf]
        %v922 = vld [vmem:[#allocation8 + $0x4] sm:$0xf]
        %v923 = vld [vmem:[#allocation8 + $0x8] sm:$0xf]
        %v924 = vld [vmem:[#allocation8 + $0xc] sm:$0xf]
        %v925 = vld [vmem:[#allocation8 + $0x10] sm:$0xf]
        %v926 = vld [vmem:[#allocation8 + $0x14] sm:$0xf]
        %v927 = vld [vmem:[#allocation8 + $0x18] sm:$0xf]
        %v928 = vld [vmem:[#allocation8 + $0x1c] sm:$0xf]
        %v929 = vld [vmem:[#allocation8 + $0x20] sm:$0xf]
        %v930 = vld [vmem:[#allocation8 + $0x24] sm:$0xf]
        %v931 = vld [vmem:[#allocation8 + $0x28] sm:$0xf]
        %v932 = vld [vmem:[#allocation8 + $0x2c] sm:$0xf]
        %v933 = vld [vmem:[#allocation8 + $0x30] sm:$0xf]
        %v934 = vld [vmem:[#allocation8 + $0x34] sm:$0xf]
        %v935 = vld [vmem:[#allocation8 + $0x38] sm:$0xf]
        %v936 = vld [vmem:[#allocation8 + $0x3c] sm:$0xf]
        %v937 = vld [vmem:[%s6] sm:$0x1]
        %v939 = vlaneseq
        %v940 = vshrl.u32 %v939, 7
        %v941 = vsub.s32 0, %v940
        %v942 = vrot.slane %v937, %v941
        %v960 = vunpack.c.l.b16 %v921
        %v961 = vunpack.c.l.b16 %v922
        %v962 = vunpack.c.l.b16 %v923
        %v963 = vunpack.c.l.b16 %v924
        %v964 = vunpack.c.l.b16 %v925
        %v965 = vunpack.c.l.b16 %v926
        %v966 = vunpack.c.l.b16 %v927
        %v967 = vunpack.c.l.b16 %v928
        %v968 = vunpack.c.l.b16 %v929
        %v969 = vunpack.c.l.b16 %v930
        %v970 = vunpack.c.l.b16 %v931
        %v971 = vunpack.c.l.b16 %v932
        %v972 = vunpack.c.l.b16 %v933
        %v973 = vunpack.c.l.b16 %v934
        %v974 = vunpack.c.l.b16 %v935
        %v975 = vunpack.c.l.b16 %v936
        %v976 = vpack.c.b16 %v961, %v960
        %v977 = vpack.c.b16 %v963, %v962
        %v978 = vpack.c.b16 %v965, %v964
        %v979 = vpack.c.b16 %v967, %v966
        %v980 = vpack.c.b16 %v969, %v968
        %v981 = vpack.c.b16 %v971, %v970
        %v982 = vpack.c.b16 %v973, %v972
        %v983 = vpack.c.b16 %v975, %v974
        %992 = vmatprep.subr.bf16.mxu0 0
        %993 = vmatpush1.bf16.msra.mxu0 %v983
        %994 = vmatprep.subr.bf16.mxu0 0
        %995 = vmatpush1.bf16.msra.mxu0 %v982
        %996 = vmatprep.subr.bf16.mxu0 0
        %997 = vmatpush1.bf16.msra.mxu0 %v981
        %998 = vmatprep.subr.bf16.mxu0 0
        %999 = vmatpush1.bf16.msra.mxu0 %v980
        %1000 = vmatprep.subr.bf16.mxu0 0
        %1001 = vmatpush1.bf16.msra.mxu0 %v979
        %1002 = vmatprep.subr.bf16.mxu0 0
        %1003 = vmatpush1.bf16.msra.mxu0 %v978
        %1004 = vmatprep.subr.bf16.mxu0 0
        %1005 = vmatpush1.bf16.msra.mxu0 %v977
        %1006 = vmatprep.subr.bf16.mxu0 0
        %1007 = vmatpush1.bf16.msra.mxu0 %v976
        %1008 = vmatprep.subr.bf16.mxu0 0
        %1009 = vmatpush2.bf16.msra.mxu0 0
        %1010 = vmatprep.subr.bf16.mxu0 0
        %1011 = vmatpush2.bf16.msra.mxu0 0
        %1012 = vmatprep.subr.bf16.mxu0 0
        %1013 = vmatpush2.bf16.msra.mxu0 0
        %1014 = vmatprep.subr.bf16.mxu0 0
        %1015 = vmatpush2.bf16.msra.mxu0 0
        %1016 = vmatprep.subr.bf16.mxu0 0
        %1017 = vmatpush2.bf16.msra.mxu0 0
        %1018 = vmatprep.subr.bf16.mxu0 0
        %1019 = vmatpush2.bf16.msra.mxu0 0
        %1020 = vmatprep.subr.bf16.mxu0 0
        %1021 = vmatpush2.bf16.msra.mxu0 0
        %1022 = vmatprep.subr.bf16.mxu0 0
        %1023 = vmatpush2.bf16.msra.mxu0 0
        %1024 = vmatprep.mubr.bf16.mxu0 0
        %1025 = vmatmul.mubr.bf16.gmra.mxu0 %v913
        %v1026 = vpop.f32.mrf.mxu0
        %v1027 = vadd.f32 %v942, %v1026
        %v1028 = vpop.f32.mrf.mxu0
        %v1029 = vpop.f32.mrf.mxu0
        %v1030 = vadd.f32 %v942, %v1029
        %v1031 = vpop.f32.mrf.mxu0
        %1032 = vmatprep.mubr.bf16.mxu0 0
        %1033 = vmatmul.mubr.bf16.gmra.mxu0 %v914
        %v1034 = vpop.f32.mrf.mxu0
        %v1035 = vadd.f32 %v942, %v1034
        %v1036 = vpop.f32.mrf.mxu0
        %v1037 = vpop.f32.mrf.mxu0
        %v1038 = vadd.f32 %v942, %v1037
        %v1039 = vpop.f32.mrf.mxu0
        %1040 = vmatprep.mubr.bf16.mxu0 0
        %1041 = vmatmul.mubr.bf16.gmra.mxu0 %v915
        %v1042 = vpop.f32.mrf.mxu0
        %v1043 = vadd.f32 %v942, %v1042
        %v1044 = vpop.f32.mrf.mxu0
        %v1045 = vpop.f32.mrf.mxu0
        %v1046 = vadd.f32 %v942, %v1045
        %v1047 = vpop.f32.mrf.mxu0
        %1048 = vmatprep.mubr.bf16.mxu0 0
        %1049 = vmatmul.mubr.bf16.gmra.mxu0 %v916
        %v1050 = vpop.f32.mrf.mxu0
        %v1051 = vadd.f32 %v942, %v1050
        %v1052 = vpop.f32.mrf.mxu0
        %v1053 = vpop.f32.mrf.mxu0
        %v1054 = vadd.f32 %v942, %v1053
        %v1055 = vpop.f32.mrf.mxu0
        %1056 = vmatprep.mubr.bf16.mxu0 0
        %1057 = vmatmul.mubr.bf16.gmra.mxu0 %v917
        %v1058 = vpop.f32.mrf.mxu0
        %v1059 = vadd.f32 %v942, %v1058
        %v1060 = vpop.f32.mrf.mxu0
        %v1061 = vpop.f32.mrf.mxu0
        %v1062 = vadd.f32 %v942, %v1061
        %v1063 = vpop.f32.mrf.mxu0
        %1064 = vmatprep.mubr.bf16.mxu0 0
        %1065 = vmatmul.mubr.bf16.gmra.mxu0 %v918
        %v1066 = vpop.f32.mrf.mxu0
        %v1067 = vadd.f32 %v942, %v1066
        %v1068 = vpop.f32.mrf.mxu0
        %v1069 = vpop.f32.mrf.mxu0
        %v1070 = vadd.f32 %v942, %v1069
        %v1071 = vpop.f32.mrf.mxu0
        %1072 = vmatprep.mubr.bf16.mxu0 0
        %1073 = vmatmul.mubr.bf16.gmra.mxu0 %v919
        %v1074 = vpop.f32.mrf.mxu0
        %v1075 = vadd.f32 %v942, %v1074
        %v1076 = vpop.f32.mrf.mxu0
        %v1077 = vpop.f32.mrf.mxu0
        %v1078 = vadd.f32 %v942, %v1077
        %v1079 = vpop.f32.mrf.mxu0
        %1080 = vmatprep.mubr.bf16.mxu0 0
        %1081 = vmatmul.mubr.bf16.gmra.mxu0 %v920
        %v1082 = vpop.f32.mrf.mxu0
        %v1083 = vadd.f32 %v942, %v1082
        %v1084 = vpop.f32.mrf.mxu0
        %v1085 = vpop.f32.mrf.mxu0
        %v1086 = vadd.f32 %v942, %v1085
        %v1087 = vpop.f32.mrf.mxu0
        %1088 = vdwg.mxu0
        %1089 = vst [vmem:[%s340] sm:$0xff] %v1027
        %1090 = vst [vmem:[%s340 + $0x8] sm:$0xff] %v1030
        %1091 = vst [vmem:[%s340 + $0x10] sm:$0xff] %v1035
        %1092 = vst [vmem:[%s340 + $0x18] sm:$0xff] %v1038
        %1093 = vst [vmem:[%s340 + $0x20] sm:$0xff] %v1043
        %1094 = vst [vmem:[%s340 + $0x28] sm:$0xff] %v1046
        %1095 = vst [vmem:[%s340 + $0x30] sm:$0xff] %v1051
        %1096 = vst [vmem:[%s340 + $0x38] sm:$0xff] %v1054
        %1097 = vst [vmem:[%s340 + $0x40] sm:$0xff] %v1059
        %1098 = vst [vmem:[%s340 + $0x48] sm:$0xff] %v1062
        %1099 = vst [vmem:[%s340 + $0x50] sm:$0xff] %v1067
        %1100 = vst [vmem:[%s340 + $0x58] sm:$0xff] %v1070
        %1101 = vst [vmem:[%s340 + $0x60] sm:$0xff] %v1075
        %1102 = vst [vmem:[%s340 + $0x68] sm:$0xff] %v1078
        %1103 = vst [vmem:[%s340 + $0x70] sm:$0xff] %v1083
        %1104 = vst [vmem:[%s340 + $0x78] sm:$0xff] %v1086
        %s1105 = sand.u32 %s186, 1
        %s1106 = scalar_lea.sflag [#allocation4], %s1105
        %s1107 = sand.u32 %s186, 1
        %s1108 = smul.addr %s1107, 128
        %s1109 = scalar_lea.vmem [#allocation10], %s1108
        // Predicated region
        $region65: #{tpu_custom_call.1} parent=47 // pred_check
          %p1110 = pneg %p196
        $region66: #{tpu_custom_call.1} parent=47 // pred_check_branch
          %1112 = sbr.rel (%p1110) target = $region68
        $region67: #{tpu_custom_call.1} parent=47 // pred_region
          %s1113 = smul.u32 16, %s26
          %s1115 = ssub.s32 2048, 2048
          %1116 = vsyncadd %s1106, %s1115
          %s1117 = smul.addr %s1113, 128
          %s1118 = scalar_lea.hbm %s7, %s1117
          %s1119 = sshll.u32 %s1109, 4
          %s1120 = int_to_ptr.vmem [resolvable:$true] %s1119
          %1125 = dma.vmem_to_hbm [thread:$0]  %s1120, 2048, %s1118, %s1106, 128, 128, 8
        $region68: #{tpu_custom_call.1} parent=47 // pred_fallthru
          _
      $region48: #{tpu_custom_call.1} parent=5 // pred_fallthru
        _
      %p1126 = scmp.le.s32.totalorder 2, %s21
      // Predicated region
      $region69: #{tpu_custom_call.1} parent=5 // pred_check
        %p1127 = pneg %p1126
      $region70: #{tpu_custom_call.1} parent=5 // pred_check_branch
        %1129 = sbr.rel (%p1127) target = $region72
      $region71: #{tpu_custom_call.1} parent=5 // pred_region
        %s1130 = ssub.s32 %s21, 2
        // Predicated region
        $region73: #{tpu_custom_call.1} parent=71 // pred_check
          %p1131 = pneg %p202
        $region74: #{tpu_custom_call.1} parent=71 // pred_check_branch
          %1133 = sbr.rel (%p1131) target = $region76
        $region75: #{tpu_custom_call.1} parent=71 // pred_region
          %s1134 = sand.u32 %s187, 1
          %s1135 = scalar_lea.sflag [#allocation4], %s1134
          %s1136 = sand.u32 %s187, 1
          %s1137 = smul.addr %s1136, 128
          %s1138 = scalar_lea.vmem [#allocation10], %s1137
          %1139 = dma.done %s1135, 2048
        $region76: #{tpu_custom_call.1} parent=71 // pred_fallthru
          _
      $region72: #{tpu_custom_call.1} parent=5 // pred_fallthru
        _
    $region6: #{tpu_custom_call.1} parent=1 // loop_footer
      %s25 = sadd.s32 1, %s21
    $region7: #{tpu_custom_call.1} parent=1 // loop_footer_branch
      %20 = sbr.rel target = $region3
    $region8: #{tpu_custom_call.1} parent=1 // loop_exit
      _
    %1140 = vsyncpa [#allocation3], 1
    %s1141 = scalar_lea.sflag [#allocation3], 1
    %1142 = vsyncpa %s1141, 1
    %1143 = vsyncpa [#allocation6], 1
    %1144 = vsyncpa [#allocation9], 1
    %1145 = vsyncpa [#allocation4], 1
    %s1146 = scalar_lea.sflag [#allocation4], 1
    %1147 = vsyncpa %s1146, 1

// kernel: tpu_custom_call.1
$region0: #{tpu_custom_call.1}
  #allocation0 [shape = 'u32[]', space=smem, size = 0x4, offset = 0x4, fixed_abs, tag = 'smem constant byte address 0x4 - core index']
  #allocation1 [shape = 'u32[144,128]{1,0:T(1,128)}', space=vmem, size = 0x12000, scoped, tag = 'internal scratch']
  %s0 = inlined_call_operand.hbm [shape: bf16[256,128], index: 0, kind: input, shape index: {}]
  %s1 = inlined_call_operand.hbm [shape: bf16[128,128], index: 1, kind: input, shape index: {}]
  %s2 = inlined_call_operand.vmem [shape: f32[1,128], index: 2, kind: input, shape index: {}]
  %s3 = inlined_call_operand.hbm [shape: bf16[128,128], index: 3, kind: input, shape index: {}]
  %s4 = inlined_call_operand.vmem [shape: f32[1,128], index: 4, kind: input, shape index: {}]
  %s5 = inlined_call_operand.hbm [shape: bf16[128,128], index: 5, kind: input, shape index: {}]
  %s6 = inlined_call_operand.vmem [shape: f32[1,128], index: 6, kind: input, shape index: {}]
  %s7 = inlined_call_operand.hbm [shape: f32[256,128], index: 7, kind: output, shape index: {}]
  %s8 = sld [smem:[#allocation0]]
  $region77: #{tpu_custom_call.1} parent=0
    _
  %s10 = ssub.s32 1, %s8
  %s11 = scalar_select 0, %s10, %s8
  $region1: #{tpu_custom_call.1} parent=0
    #allocation2 [shape = 'u8[65536]{0}', space=vmem, size = 0x10000, scoped, tag = 'input window, operand 0']
    #allocation3 [shape = 's32[2]{0}', space=sflag, size = 0x8, scoped, tag = 'scoped memory for tpu_custom_call.1']
    #allocation4 [shape = 's32[2]{0}', space=sflag, size = 0x8, scoped, tag = 'scoped memory for tpu_custom_call.1']
    #allocation5 [shape = 'u8[32768]{0}', space=vmem, size = 0x8000, scoped, tag = 'input window, operand 1, single buffered']
    #allocation6 [shape = 's32[1]{0}', space=sflag, size = 0x4, scoped, tag = 'scoped memory for tpu_custom_call.1']
    #allocation7 [shape = 'u8[32768]{0}', space=vmem, size = 0x8000, scoped, tag = 'input window, operand 3, single buffered']
    #allocation8 [shape = 'u8[32768]{0}', space=vmem, size = 0x8000, scoped, tag = 'input window, operand 5, single buffered']
    #allocation9 [shape = 's32[1]{0}', space=sflag, size = 0x4, scoped, tag = 'scoped memory for tpu_custom_call.1']
    #allocation10 [shape = 'u8[131072]{0}', space=vmem, size = 0x20000, scoped, tag = 'output window, operand 0']
    %12 = vsyncpa [#allocation3], 0
    %s13 = scalar_lea.sflag [#allocation3], 1
    %14 = vsyncpa %s13, 0
    %15 = vsyncpa [#allocation6], 0
    %16 = vsyncpa [#allocation9], 0
    %17 = vsyncpa [#allocation4], 0
    %s18 = scalar_lea.sflag [#allocation4], 1
    %19 = vsyncpa %s18, 0
    loop: start=0, step=1, limit=4
    $region2: #{tpu_custom_call.1} parent=1 // loop_pre_header
      _
    $region3: #{tpu_custom_call.1} parent=1 // loop_header
      %s21 = sphi 0, %s25
      %p22 = scmp.ge.s32.totalorder %s21, 4
      %s31 = sphi 0, %s33
      %s34 = sphi 0, %s31
      %s35 = sphi 0, %s34
      %s51 = sphi 0, %s35
      %s55 = sphi 0, %s55
      %s57 = sphi 0, %s55
      %s58 = sphi 0, %s57
      %s72 = sphi 0, %s58
      %s76 = sphi 0, %s76
      %s78 = sphi 0, %s76
      %s79 = sphi 0, %s78
      %s93 = sphi 0, %s79
      %s97 = sphi 0, %s97
      %s99 = sphi 0, %s97
      %s100 = sphi 0, %s99
      %s114 = sphi 0, %s100
      %s118 = sphi 0, %s118
      %s120 = sphi 0, %s118
      %s121 = sphi 0, %s120
      %s135 = sphi 0, %s121
      %s139 = sphi 0, %s139
      %s141 = sphi 0, %s139
      %s142 = sphi 0, %s141
      %s156 = sphi 0, %s142
      %s160 = sphi 0, %s160
      %s162 = sphi 0, %s160
      %s163 = sphi 0, %s162
      %s177 = sphi 0, %s163
      %s183 = sphi 0, %s185
      %s186 = sphi 0, %s183
      %s187 = sphi 0, %s186
      %s203 = sphi 0, %s187
    $region4: #{tpu_custom_call.1} parent=1 // loop_header_branch
      %24 = sbr.rel (%p22) target = $region8
    $region5: #{tpu_custom_call.1} parent=1 // loop_body
      %s26 = ssub.s32 %s21, 1
      %s27 = ssub.s32 %s21, 2
      %s28 = sadd.s32 %s21, 1
      %s29 = ssub.s32 %s21, %s28
      %p30 = scmp.eq.s32.totalorder %s29, 0
      %s32 = sadd.s32 %s31, 1
      %s33 = scalar_select %p30, %s31, %s32
      %p36 = pneg %p30
      %p37 = scmp.eq.s32.totalorder %s21, 1
      %p38 = por %p36, %p37
      %p39 = scmp.ne.s32.totalorder %s31, %s34
      %p40 = scmp.eq.s32.totalorder %s21, 0
      %p41 = por %p39, %p40
      %p42 = scmp.ne.s32.totalorder %s31, %s34
      %p43 = scmp.eq.s32.totalorder %s26, 1
      %p44 = por %p42, %p43
      %p45 = scmp.ne.s32.totalorder %s34, %s35
      %p46 = scmp.eq.s32.totalorder %s26, 0
      %p47 = por %p45, %p46
      %p48 = scmp.ne.s32.totalorder %s34, %s35
      %p49 = scmp.eq.s32.totalorder %s27, 1
      %p50 = por %p48, %p49
      %p52 = scmp.ne.s32.totalorder %s35, %s51
      %p53 = scmp.eq.s32.totalorder %s27, 0
      %p54 = por %p52, %p53
      %s56 = sadd.s32 %s55, 1
      %p59 = scmp.eq.s32.totalorder %s21, 1
      %p60 = scmp.ne.s32.totalorder %s55, %s57
      %p61 = scmp.eq.s32.totalorder %s21, 0
      %p62 = por %p60, %p61
      %p63 = scmp.ne.s32.totalorder %s55, %s57
      %p64 = scmp.eq.s32.totalorder %s26, 1
      %p65 = por %p63, %p64
      %p66 = scmp.ne.s32.totalorder %s57, %s58
      %p67 = scmp.eq.s32.totalorder %s26, 0
      %p68 = por %p66, %p67
      %p69 = scmp.ne.s32.totalorder %s57, %s58
      %p70 = scmp.eq.s32.totalorder %s27, 1
      %p71 = por %p69, %p70
      %p73 = scmp.ne.s32.totalorder %s58, %s72
      %p74 = scmp.eq.s32.totalorder %s27, 0
      %p75 = por %p73, %p74
      %s77 = sadd.s32 %s76, 1
      %p80 = scmp.eq.s32.totalorder %s21, 1
      %p81 = scmp.ne.s32.totalorder %s76, %s78
      %p82 = scmp.eq.s32.totalorder %s21, 0
      %p83 = por %p81, %p82
      %p84 = scmp.ne.s32.totalorder %s76, %s78
      %p85 = scmp.eq.s32.totalorder %s26, 1
      %p86 = por %p84, %p85
      %p87 = scmp.ne.s32.totalorder %s78, %s79
      %p88 = scmp.eq.s32.totalorder %s26, 0
      %p89 = por %p87, %p88
      %p90 = scmp.ne.s32.totalorder %s78, %s79
      %p91 = scmp.eq.s32.totalorder %s27, 1
      %p92 = por %p90, %p91
      %p94 = scmp.ne.s32.totalorder %s79, %s93
      %p95 = scmp.eq.s32.totalorder %s27, 0
      %p96 = por %p94, %p95
      %s98 = sadd.s32 %s97, 1
      %p101 = scmp.eq.s32.totalorder %s21, 1
      %p102 = scmp.ne.s32.totalorder %s97, %s99
      %p103 = scmp.eq.s32.totalorder %s21, 0
      %p104 = por %p102, %p103
      %p105 = scmp.ne.s32.totalorder %s97, %s99
      %p106 = scmp.eq.s32.totalorder %s26, 1
      %p107 = por %p105, %p106
      %p108 = scmp.ne.s32.totalorder %s99, %s100
      %p109 = scmp.eq.s32.totalorder %s26, 0
      %p110 = por %p108, %p109
      %p111 = scmp.ne.s32.totalorder %s99, %s100
      %p112 = scmp.eq.s32.totalorder %s27, 1
      %p113 = por %p111, %p112
      %p115 = scmp.ne.s32.totalorder %s100, %s114
      %p116 = scmp.eq.s32.totalorder %s27, 0
      %p117 = por %p115, %p116
      %s119 = sadd.s32 %s118, 1
      %p122 = scmp.eq.s32.totalorder %s21, 1
      %p123 = scmp.ne.s32.totalorder %s118, %s120
      %p124 = scmp.eq.s32.totalorder %s21, 0
      %p125 = por %p123, %p124
      %p126 = scmp.ne.s32.totalorder %s118, %s120
      %p127 = scmp.eq.s32.totalorder %s26, 1
      %p128 = por %p126, %p127
      %p129 = scmp.ne.s32.totalorder %s120, %s121
      %p130 = scmp.eq.s32.totalorder %s26, 0
      %p131 = por %p129, %p130
      %p132 = scmp.ne.s32.totalorder %s120, %s121
      %p133 = scmp.eq.s32.totalorder %s27, 1
      %p134 = por %p132, %p133
      %p136 = scmp.ne.s32.totalorder %s121, %s135
      %p137 = scmp.eq.s32.totalorder %s27, 0
      %p138 = por %p136, %p137
      %s140 = sadd.s32 %s139, 1
      %p143 = scmp.eq.s32.totalorder %s21, 1
      %p144 = scmp.ne.s32.totalorder %s139, %s141
      %p145 = scmp.eq.s32.totalorder %s21, 0
      %p146 = por %p144, %p145
      %p147 = scmp.ne.s32.totalorder %s139, %s141
      %p148 = scmp.eq.s32.totalorder %s26, 1
      %p149 = por %p147, %p148
      %p150 = scmp.ne.s32.totalorder %s141, %s142
      %p151 = scmp.eq.s32.totalorder %s26, 0
      %p152 = por %p150, %p151
      %p153 = scmp.ne.s32.totalorder %s141, %s142
      %p154 = scmp.eq.s32.totalorder %s27, 1
      %p155 = por %p153, %p154
      %p157 = scmp.ne.s32.totalorder %s142, %s156
      %p158 = scmp.eq.s32.totalorder %s27, 0
      %p159 = por %p157, %p158
      %s161 = sadd.s32 %s160, 1
      %p164 = scmp.eq.s32.totalorder %s21, 1
      %p165 = scmp.ne.s32.totalorder %s160, %s162
      %p166 = scmp.eq.s32.totalorder %s21, 0
      %p167 = por %p165, %p166
      %p168 = scmp.ne.s32.totalorder %s160, %s162
      %p169 = scmp.eq.s32.totalorder %s26, 1
      %p170 = por %p168, %p169
      %p171 = scmp.ne.s32.totalorder %s162, %s163
      %p172 = scmp.eq.s32.totalorder %s26, 0
      %p173 = por %p171, %p172
      %p174 = scmp.ne.s32.totalorder %s162, %s163
      %p175 = scmp.eq.s32.totalorder %s27, 1
      %p176 = por %p174, %p175
      %p178 = scmp.ne.s32.totalorder %s163, %s177
      %p179 = scmp.eq.s32.totalorder %s27, 0
      %p180 = por %p178, %p179
      %s181 = ssub.s32 %s21, %s28
      %p182 = scmp.eq.s32.totalorder %s181, 0
      %s184 = sadd.s32 %s183, 1
      %s185 = scalar_select %p182, %s183, %s184
      %p188 = pneg %p182
      %p189 = scmp.eq.s32.totalorder %s21, 1
      %p190 = por %p188, %p189
      %p191 = scmp.ne.s32.totalorder %s183, %s186
      %p192 = scmp.eq.s32.totalorder %s21, 0
      %p193 = por %p191, %p192
      %p194 = scmp.ne.s32.totalorder %s183, %s186
      %p195 = scmp.eq.s32.totalorder %s26, 1
      %p196 = por %p194, %p195
      %p197 = scmp.ne.s32.totalorder %s186, %s187
      %p198 = scmp.eq.s32.totalorder %s26, 0
      %p199 = por %p197, %p198
      %p200 = scmp.ne.s32.totalorder %s186, %s187
      %p201 = scmp.eq.s32.totalorder %s27, 1
      %p202 = por %p200, %p201
      %p204 = scmp.ne.s32.totalorder %s187, %s203
      %p205 = scmp.eq.s32.totalorder %s27, 0
      %p206 = por %p204, %p205
      %p207 = scmp.le.s32.totalorder 1, %s21
      %p208 = scmp.lt.s32.totalorder %s21, 3
      %p209 = pnand %p207, %p208
      %p210 = pneg %p209
      // Predicated region
      $region9: #{tpu_custom_call.1} parent=5 // pred_check
        _
      $region10: #{tpu_custom_call.1} parent=5 // pred_check_branch
        %212 = sbr.rel (%p209) target = $region12
      $region11: #{tpu_custom_call.1} parent=5 // pred_region
        %s213 = ssub.s32 %s21, 1
        // Predicated region
        $region13: #{tpu_custom_call.1} parent=11 // pred_check
          %p214 = pneg %p68
        $region14: #{tpu_custom_call.1} parent=11 // pred_check_branch
          %216 = sbr.rel (%p214) target = $region16
        $region15: #{tpu_custom_call.1} parent=11 // pred_region
          %s218 = ssub.s32 1024, 1024
          %219 = vsyncadd [#allocation6], %s218
          %s220 = sshll.u32 [#allocation5], 4
          %s221 = int_to_ptr.vmem [resolvable:$true] %s220
          %226 = dma.hbm_to_vmem [thread:$0]  %s1, 1024, %s221, [#allocation6], 64, 64, 4
        $region16: #{tpu_custom_call.1} parent=11 // pred_fallthru
          _
        // Predicated region
        $region17: #{tpu_custom_call.1} parent=11 // pred_check
          %p227 = pneg %p89
        $region18: #{tpu_custom_call.1} parent=11 // pred_check_branch
          %229 = sbr.rel (%p227) target = $region20
        $region19: #{tpu_custom_call.1} parent=11 // pred_region
          _
        $region20: #{tpu_custom_call.1} parent=11 // pred_fallthru
          _
        // Predicated region
        $region21: #{tpu_custom_call.1} parent=11 // pred_check
          %p230 = pneg %p110
        $region22: #{tpu_custom_call.1} parent=11 // pred_check_branch
          %232 = sbr.rel (%p230) target = $region24
        $region23: #{tpu_custom_call.1} parent=11 // pred_region
          %s234 = ssub.s32 1024, 1024
          %235 = vsyncadd [#allocation6], %s234
          %s236 = sshll.u32 [#allocation7], 4
          %s237 = int_to_ptr.vmem [resolvable:$true] %s236
          %242 = dma.hbm_to_vmem [thread:$0]  %s3, 1024, %s237, [#allocation6], 64, 64, 4
        $region24: #{tpu_custom_call.1} parent=11 // pred_fallthru
          _
        // Predicated region
        $region25: #{tpu_custom_call.1} parent=11 // pred_check
          %p243 = pneg %p131
        $region26: #{tpu_custom_call.1} parent=11 // pred_check_branch
          %245 = sbr.rel (%p243) target = $region28
        $region27: #{tpu_custom_call.1} parent=11 // pred_region
          _
        $region28: #{tpu_custom_call.1} parent=11 // pred_fallthru
          _
        // Predicated region
        $region29: #{tpu_custom_call.1} parent=11 // pred_check
          %p246 = pneg %p152
        $region30: #{tpu_custom_call.1} parent=11 // pred_check_branch
          %248 = sbr.rel (%p246) target = $region32
        $region31: #{tpu_custom_call.1} parent=11 // pred_region
          %s250 = ssub.s32 1024, 1024
          %251 = vsyncadd [#allocation9], %s250
          %s252 = sshll.u32 [#allocation8], 4
          %s253 = int_to_ptr.vmem [resolvable:$true] %s252
          %258 = dma.hbm_to_vmem [thread:$0]  %s5, 1024, %s253, [#allocation9], 64, 64, 4
        $region32: #{tpu_custom_call.1} parent=11 // pred_fallthru
          _
        // Predicated region
        $region33: #{tpu_custom_call.1} parent=11 // pred_check
          %p259 = pneg %p173
        $region34: #{tpu_custom_call.1} parent=11 // pred_check_branch
          %261 = sbr.rel (%p259) target = $region36
        $region35: #{tpu_custom_call.1} parent=11 // pred_region
          _
        $region36: #{tpu_custom_call.1} parent=11 // pred_fallthru
          _
      $region12: #{tpu_custom_call.1} parent=5 // pred_fallthru
        _
      %p262 = scmp.lt.s32.totalorder %s21, 2
      // Predicated region
      $region37: #{tpu_custom_call.1} parent=5 // pred_check
        %p263 = pneg %p262
      $region38: #{tpu_custom_call.1} parent=5 // pred_check_branch
        %265 = sbr.rel (%p263) target = $region40
      $region39: #{tpu_custom_call.1} parent=5 // pred_region
        // Predicated region
        $region41: #{tpu_custom_call.1} parent=39 // pred_check
          %p266 = pneg %p41
        $region42: #{tpu_custom_call.1} parent=39 // pred_check_branch
          %268 = sbr.rel (%p266) target = $region44
        $region43: #{tpu_custom_call.1} parent=39 // pred_region
          %s269 = sand.u32 %s31, 1
          %s270 = scalar_lea.sflag [#allocation3], %s269
          %s271 = sand.u32 %s31, 1
          %s272 = smul.addr %s271, 64
          %s273 = scalar_lea.vmem [#allocation2], %s272
          %s274 = smul.u32 16, %s21
          %s276 = ssub.s32 1024, 1024
          %277 = vsyncadd %s270, %s276
          %s278 = smul.addr %s274, 64
          %s279 = scalar_lea.hbm %s0, %s278
          %s280 = sshll.u32 %s273, 4
          %s281 = int_to_ptr.vmem [resolvable:$true] %s280
          %286 = dma.hbm_to_vmem [thread:$0]  %s279, 1024, %s281, %s270, 64, 64, 4
        $region44: #{tpu_custom_call.1} parent=39 // pred_fallthru
          _
      $region40: #{tpu_custom_call.1} parent=5 // pred_fallthru
        _
      %p287 = scmp.le.s32.totalorder 1, %s21
      %p288 = scmp.lt.s32.totalorder %s21, 3
      %p289 = pnand %p287, %p288
      %p290 = pneg %p289
      // Predicated region
      $region45: #{tpu_custom_call.1} parent=5 // pred_check
        _
      $region46: #{tpu_custom_call.1} parent=5 // pred_check_branch
        %292 = sbr.rel (%p289) target = $region48
      $region47: #{tpu_custom_call.1} parent=5 // pred_region
        %s293 = ssub.s32 %s21, 1
        %s294 = sand.u32 %s34, 1
        %s295 = scalar_lea.sflag [#allocation3], %s294
        %s296 = sand.u32 %s34, 1
        %s297 = smul.addr %s296, 64
        %s298 = scalar_lea.vmem [#allocation2], %s297
        // Predicated region
        $region49: #{tpu_custom_call.1} parent=47 // pred_check
          %p299 = pneg %p47
        $region50: #{tpu_custom_call.1} parent=47 // pred_check_branch
          %301 = sbr.rel (%p299) target = $region52
        $region51: #{tpu_custom_call.1} parent=47 // pred_region
          %302 = dma.done %s295, 1024
        $region52: #{tpu_custom_call.1} parent=47 // pred_fallthru
          _
        // Predicated region
        $region53: #{tpu_custom_call.1} parent=47 // pred_check
          %p303 = pneg %p68
        $region54: #{tpu_custom_call.1} parent=47 // pred_check_branch
          %305 = sbr.rel (%p303) target = $region56
        $region55: #{tpu_custom_call.1} parent=47 // pred_region
          %306 = dma.done [#allocation6], 1024
        $region56: #{tpu_custom_call.1} parent=47 // pred_fallthru
          _
        // Predicated region
        $region57: #{tpu_custom_call.1} parent=47 // pred_check
          %p307 = pneg %p110
        $region58: #{tpu_custom_call.1} parent=47 // pred_check_branch
          %309 = sbr.rel (%p307) target = $region60
        $region59: #{tpu_custom_call.1} parent=47 // pred_region
          %310 = dma.done [#allocation6], 1024
        $region60: #{tpu_custom_call.1} parent=47 // pred_fallthru
          _
        // Predicated region
        $region61: #{tpu_custom_call.1} parent=47 // pred_check
          %p311 = pneg %p152
        $region62: #{tpu_custom_call.1} parent=47 // pred_check_branch
          %313 = sbr.rel (%p311) target = $region64
        $region63: #{tpu_custom_call.1} parent=47 // pred_region
          %314 = dma.done [#allocation9], 1024
        $region64: #{tpu_custom_call.1} parent=47 // pred_fallthru
          _
        %s315 = sand.u32 %s34, 1
        %s316 = scalar_lea.sflag [#allocation3], %s315
        %s317 = sand.u32 %s34, 1
        %s318 = smul.addr %s317, 64
        %s319 = scalar_lea.vmem [#allocation2], %s318
        %p320 = pneg %p47
        %p321 = pneg %p44
        %p322 = pneg %p68
        %p323 = pneg %p65
        %p324 = pneg %p89
        %p325 = pneg %p86
        %p326 = pneg %p110
        %p327 = pneg %p107
        %p328 = pneg %p131
        %p329 = pneg %p128
        %p330 = pneg %p152
        %p331 = pneg %p149
        %p332 = pneg %p173
        %p333 = pneg %p170
        %p334 = pneg %p199
        %p335 = pneg %p196
        %s336 = sand.u32 %s186, 1
        %s337 = scalar_lea.sflag [#allocation4], %s336
        %s338 = sand.u32 %s186, 1
        %s339 = smul.addr %s338, 128
        %s340 = scalar_lea.vmem [#allocation10], %s339
        %s341 = smul.u32 16, %s26
        %s342 = smul.u32 16, %s26
        %v344 = vld [vmem:[%s298] sm:$0xf]
        %v345 = vld [vmem:[%s298 + $0x4] sm:$0xf]
        %v346 = vld [vmem:[%s298 + $0x8] sm:$0xf]
        %v347 = vld [vmem:[%s298 + $0xc] sm:$0xf]
        %v348 = vld [vmem:[%s298 + $0x10] sm:$0xf]
        %v349 = vld [vmem:[%s298 + $0x14] sm:$0xf]
        %v350 = vld [vmem:[%s298 + $0x18] sm:$0xf]
        %v351 = vld [vmem:[%s298 + $0x1c] sm:$0xf]
        %v352 = vld [vmem:[%s298 + $0x20] sm:$0xf]
        %v353 = vld [vmem:[%s298 + $0x24] sm:$0xf]
        %v354 = vld [vmem:[%s298 + $0x28] sm:$0xf]
        %v355 = vld [vmem:[%s298 + $0x2c] sm:$0xf]
        %v356 = vld [vmem:[%s298 + $0x30] sm:$0xf]
        %v357 = vld [vmem:[%s298 + $0x34] sm:$0xf]
        %v358 = vld [vmem:[%s298 + $0x38] sm:$0xf]
        %v359 = vld [vmem:[%s298 + $0x3c] sm:$0xf]
        %v360 = vld [vmem:[#allocation5] sm:$0xf]
        %v361 = vld [vmem:[#allocation5 + $0x4] sm:$0xf]
        %v362 = vld [vmem:[#allocation5 + $0x8] sm:$0xf]
        %v363 = vld [vmem:[#allocation5 + $0xc] sm:$0xf]
        %v364 = vld [vmem:[#allocation5 + $0x10] sm:$0xf]
        %v365 = vld [vmem:[#allocation5 + $0x14] sm:$0xf]
        %v366 = vld [vmem:[#allocation5 + $0x18] sm:$0xf]
        %v367 = vld [vmem:[#allocation5 + $0x1c] sm:$0xf]
        %v368 = vld [vmem:[#allocation5 + $0x20] sm:$0xf]
        %v369 = vld [vmem:[#allocation5 + $0x24] sm:$0xf]
        %v370 = vld [vmem:[#allocation5 + $0x28] sm:$0xf]
        %v371 = vld [vmem:[#allocation5 + $0x2c] sm:$0xf]
        %v372 = vld [vmem:[#allocation5 + $0x30] sm:$0xf]
        %v373 = vld [vmem:[#allocation5 + $0x34] sm:$0xf]
        %v374 = vld [vmem:[#allocation5 + $0x38] sm:$0xf]
        %v375 = vld [vmem:[#allocation5 + $0x3c] sm:$0xf]
        %v376 = vld [vmem:[%s2] sm:$0x1]
        %v378 = vlaneseq
        %v379 = vshrl.u32 %v378, 7
        %v380 = vsub.s32 0, %v379
        %v381 = vrot.slane %v376, %v380
        %v399 = vunpack.c.l.b16 %v344
        %v400 = vunpack.c.l.b16 %v345
        %v401 = vunpack.c.l.b16 %v346
        %v402 = vunpack.c.l.b16 %v347
        %v403 = vunpack.c.l.b16 %v348
        %v404 = vunpack.c.l.b16 %v349
        %v405 = vunpack.c.l.b16 %v350
        %v406 = vunpack.c.l.b16 %v351
        %v407 = vunpack.c.l.b16 %v352
        %v408 = vunpack.c.l.b16 %v353
        %v409 = vunpack.c.l.b16 %v354
        %v410 = vunpack.c.l.b16 %v355
        %v411 = vunpack.c.l.b16 %v356
        %v412 = vunpack.c.l.b16 %v357
        %v413 = vunpack.c.l.b16 %v358
        %v414 = vunpack.c.l.b16 %v359
        %v415 = vpack.c.b16 %v400, %v399
        %v416 = vpack.c.b16 %v402, %v401
        %v417 = vpack.c.b16 %v404, %v403
        %v418 = vpack.c.b16 %v406, %v405
        %v419 = vpack.c.b16 %v408, %v407
        %v420 = vpack.c.b16 %v410, %v409
        %v421 = vpack.c.b16 %v412, %v411
        %v422 = vpack.c.b16 %v414, %v413
        %v447 = vunpack.c.l.b16 %v360
        %v448 = vunpack.c.l.b16 %v361
        %v449 = vunpack.c.l.b16 %v362
        %v450 = vunpack.c.l.b16 %v363
        %v451 = vunpack.c.l.b16 %v364
        %v452 = vunpack.c.l.b16 %v365
        %v453 = vunpack.c.l.b16 %v366
        %v454 = vunpack.c.l.b16 %v367
        %v455 = vunpack.c.l.b16 %v368
        %v456 = vunpack.c.l.b16 %v369
        %v457 = vunpack.c.l.b16 %v370
        %v458 = vunpack.c.l.b16 %v371
        %v459 = vunpack.c.l.b16 %v372
        %v460 = vunpack.c.l.b16 %v373
        %v461 = vunpack.c.l.b16 %v374
        %v462 = vunpack.c.l.b16 %v375
        %v463 = vpack.c.b16 %v448, %v447
        %v464 = vpack.c.b16 %v450, %v449
        %v465 = vpack.c.b16 %v452, %v451
        %v466 = vpack.c.b16 %v454, %v453
        %v467 = vpack.c.b16 %v456, %v455
        %v468 = vpack.c.b16 %v458, %v457
        %v469 = vpack.c.b16 %v460, %v459
        %v470 = vpack.c.b16 %v462, %v461
        %479 = vmatprep.subr.bf16.mxu0 0
        %480 = vmatpush1.bf16.msra.mxu0 %v470
        %481 = vmatprep.subr.bf16.mxu0 0
        %482 = vmatpush1.bf16.msra.mxu0 %v469
        %483 = vmatprep.subr.bf16.mxu0 0
        %484 = vmatpush1.bf16.msra.mxu0 %v468
        %485 = vmatprep.subr.bf16.mxu0 0
        %486 = vmatpush1.bf16.msra.mxu0 %v467
        %487 = vmatprep.subr.bf16.mxu0 0
        %488 = vmatpush1.bf16.msra.mxu0 %v466
        %489 = vmatprep.subr.bf16.mxu0 0
        %490 = vmatpush1.bf16.msra.mxu0 %v465
        %491 = vmatprep.subr.bf16.mxu0 0
        %492 = vmatpush1.bf16.msra.mxu0 %v464
        %493 = vmatprep.subr.bf16.mxu0 0
        %494 = vmatpush1.bf16.msra.mxu0 %v463
        %495 = vmatprep.subr.bf16.mxu0 0
        %496 = vmatpush2.bf16.msra.mxu0 0
        %497 = vmatprep.subr.bf16.mxu0 0
        %498 = vmatpush2.bf16.msra.mxu0 0
        %499 = vmatprep.subr.bf16.mxu0 0
        %500 = vmatpush2.bf16.msra.mxu0 0
        %501 = vmatprep.subr.bf16.mxu0 0
        %502 = vmatpush2.bf16.msra.mxu0 0
        %503 = vmatprep.subr.bf16.mxu0 0
        %504 = vmatpush2.bf16.msra.mxu0 0
        %505 = vmatprep.subr.bf16.mxu0 0
        %506 = vmatpush2.bf16.msra.mxu0 0
        %507 = vmatprep.subr.bf16.mxu0 0
        %508 = vmatpush2.bf16.msra.mxu0 0
        %509 = vmatprep.subr.bf16.mxu0 0
        %510 = vmatpush2.bf16.msra.mxu0 0
        %511 = vmatprep.mubr.bf16.mxu0 0
        %512 = vmatmul.mubr.bf16.gmra.mxu0 %v415
        %v513 = vpop.f32.mrf.mxu0
        %v514 = vadd.f32 %v381, %v513
        %v515 = vpop.f32.mrf.mxu0
        %v516 = vpop.f32.mrf.mxu0
        %v517 = vadd.f32 %v381, %v516
        %v518 = vpop.f32.mrf.mxu0
        %519 = vmatprep.mubr.bf16.mxu0 0
        %520 = vmatmul.mubr.bf16.gmra.mxu0 %v416
        %v521 = vpop.f32.mrf.mxu0
        %v522 = vadd.f32 %v381, %v521
        %v523 = vpop.f32.mrf.mxu0
        %v524 = vpop.f32.mrf.mxu0
        %v525 = vadd.f32 %v381, %v524
        %v526 = vpop.f32.mrf.mxu0
        %527 = vmatprep.mubr.bf16.mxu0 0
        %528 = vmatmul.mubr.bf16.gmra.mxu0 %v417
        %v529 = vpop.f32.mrf.mxu0
        %v530 = vadd.f32 %v381, %v529
        %v531 = vpop.f32.mrf.mxu0
        %v532 = vpop.f32.mrf.mxu0
        %v533 = vadd.f32 %v381, %v532
        %v534 = vpop.f32.mrf.mxu0
        %535 = vmatprep.mubr.bf16.mxu0 0
        %536 = vmatmul.mubr.bf16.gmra.mxu0 %v418
        %v537 = vpop.f32.mrf.mxu0
        %v538 = vadd.f32 %v381, %v537
        %v539 = vpop.f32.mrf.mxu0
        %v540 = vpop.f32.mrf.mxu0
        %v541 = vadd.f32 %v381, %v540
        %v542 = vpop.f32.mrf.mxu0
        %543 = vmatprep.mubr.bf16.mxu0 0
        %544 = vmatmul.mubr.bf16.gmra.mxu0 %v419
        %v545 = vpop.f32.mrf.mxu0
        %v546 = vadd.f32 %v381, %v545
        %v547 = vpop.f32.mrf.mxu0
        %v548 = vpop.f32.mrf.mxu0
        %v549 = vadd.f32 %v381, %v548
        %v550 = vpop.f32.mrf.mxu0
        %551 = vmatprep.mubr.bf16.mxu0 0
        %552 = vmatmul.mubr.bf16.gmra.mxu0 %v420
        %v553 = vpop.f32.mrf.mxu0
        %v554 = vadd.f32 %v381, %v553
        %v555 = vpop.f32.mrf.mxu0
        %v556 = vpop.f32.mrf.mxu0
        %v557 = vadd.f32 %v381, %v556
        %v558 = vpop.f32.mrf.mxu0
        %559 = vmatprep.mubr.bf16.mxu0 0
        %560 = vmatmul.mubr.bf16.gmra.mxu0 %v421
        %v561 = vpop.f32.mrf.mxu0
        %v562 = vadd.f32 %v381, %v561
        %v563 = vpop.f32.mrf.mxu0
        %v564 = vpop.f32.mrf.mxu0
        %v565 = vadd.f32 %v381, %v564
        %v566 = vpop.f32.mrf.mxu0
        %567 = vmatprep.mubr.bf16.mxu0 0
        %568 = vmatmul.mubr.bf16.gmra.mxu0 %v422
        %v569 = vpop.f32.mrf.mxu0
        %v570 = vadd.f32 %v381, %v569
        %v571 = vpop.f32.mrf.mxu0
        %v572 = vpop.f32.mrf.mxu0
        %v573 = vadd.f32 %v381, %v572
        %v574 = vpop.f32.mrf.mxu0
        %575 = vdwg.mxu0
        %v576 = vmul.f32 %v514, 0.5
        %v577 = vmul.f32 %v517, 0.5
        %v578 = vmul.f32 %v522, 0.5
        %v579 = vmul.f32 %v525, 0.5
        %v580 = vmul.f32 %v530, 0.5
        %v581 = vmul.f32 %v533, 0.5
        %v582 = vmul.f32 %v538, 0.5
        %v583 = vmul.f32 %v541, 0.5
        %v584 = vmul.f32 %v546, 0.5
        %v585 = vmul.f32 %v549, 0.5
        %v586 = vmul.f32 %v554, 0.5
        %v587 = vmul.f32 %v557, 0.5
        %v588 = vmul.f32 %v562, 0.5
        %v589 = vmul.f32 %v565, 0.5
        %v590 = vmul.f32 %v570, 0.5
        %v591 = vmul.f32 %v573, 0.5
        %v592 = vrcp.pop 1.4142135
        %v593 = vmul.f32 %v514, %v592
        %v594 = vmul.f32 %v517, %v592
        %v595 = vmul.f32 %v522, %v592
        %v596 = vmul.f32 %v525, %v592
        %v597 = vmul.f32 %v530, %v592
        %v598 = vmul.f32 %v533, %v592
        %v599 = vmul.f32 %v538, %v592
        %v600 = vmul.f32 %v541, %v592
        %v601 = vmul.f32 %v546, %v592
        %v602 = vmul.f32 %v549, %v592
        %v603 = vmul.f32 %v554, %v592
        %v604 = vmul.f32 %v557, %v592
        %v605 = vmul.f32 %v562, %v592
        %v606 = vmul.f32 %v565, %v592
        %v607 = vmul.f32 %v570, %v592
        %v608 = vmul.f32 %v573, %v592
        %v609 = verf.f32.pop %v593
        %v610 = verf.f32.pop %v594
        %v611 = verf.f32.pop %v595
        %v612 = verf.f32.pop %v596
        %v613 = verf.f32.pop %v597
        %v614 = verf.f32.pop %v598
        %v615 = verf.f32.pop %v599
        %v616 = verf.f32.pop %v600
        %v617 = verf.f32.pop %v601
        %v618 = verf.f32.pop %v602
        %v619 = verf.f32.pop %v603
        %v620 = verf.f32.pop %v604
        %v621 = verf.f32.pop %v605
        %v622 = verf.f32.pop %v606
        %v623 = verf.f32.pop %v607
        %v624 = verf.f32.pop %v608
        %v625 = vadd.f32 %v609, 1.0
        %v626 = vadd.f32 %v610, 1.0
        %v627 = vadd.f32 %v611, 1.0
        %v628 = vadd.f32 %v612, 1.0
        %v629 = vadd.f32 %v613, 1.0
        %v630 = vadd.f32 %v614, 1.0
        %v631 = vadd.f32 %v615, 1.0
        %v632 = vadd.f32 %v616, 1.0
        %v633 = vadd.f32 %v617, 1.0
        %v634 = vadd.f32 %v618, 1.0
        %v635 = vadd.f32 %v619, 1.0
        %v636 = vadd.f32 %v620, 1.0
        %v637 = vadd.f32 %v621, 1.0
        %v638 = vadd.f32 %v622, 1.0
        %v639 = vadd.f32 %v623, 1.0
        %v640 = vadd.f32 %v624, 1.0
        %v641 = vmul.f32 %v576, %v625
        %v642 = vmul.f32 %v577, %v626
        %v643 = vmul.f32 %v578, %v627
        %v644 = vmul.f32 %v579, %v628
        %v645 = vmul.f32 %v580, %v629
        %v646 = vmul.f32 %v581, %v630
        %v647 = vmul.f32 %v582, %v631
        %v648 = vmul.f32 %v583, %v632
        %v649 = vmul.f32 %v584, %v633
        %v650 = vmul.f32 %v585, %v634
        %v651 = vmul.f32 %v586, %v635
        %v652 = vmul.f32 %v587, %v636
        %v653 = vmul.f32 %v588, %v637
        %v654 = vmul.f32 %v589, %v638
        %v655 = vmul.f32 %v590, %v639
        %v656 = vmul.f32 %v591, %v640
        %v657 = vpack.c.bf16 %v642, %v641
        %v658 = vpack.c.bf16 %v644, %v643
        %v659 = vpack.c.bf16 %v646, %v645
        %v660 = vpack.c.bf16 %v648, %v647
        %v661 = vpack.c.bf16 %v650, %v649
        %v662 = vpack.c.bf16 %v652, %v651
        %v663 = vpack.c.bf16 %v654, %v653
        %v664 = vpack.c.bf16 %v656, %v655
        %v665 = vld [vmem:[#allocation7] sm:$0xf]
        %v666 = vld [vmem:[#allocation7 + $0x4] sm:$0xf]
        %v667 = vld [vmem:[#allocation7 + $0x8] sm:$0xf]
        %v668 = vld [vmem:[#allocation7 + $0xc] sm:$0xf]
        %v669 = vld [vmem:[#allocation7 + $0x10] sm:$0xf]
        %v670 = vld [vmem:[#allocation7 + $0x14] sm:$0xf]
        %v671 = vld [vmem:[#allocation7 + $0x18] sm:$0xf]
        %v672 = vld [vmem:[#allocation7 + $0x1c] sm:$0xf]
        %v673 = vld [vmem:[#allocation7 + $0x20] sm:$0xf]
        %v674 = vld [vmem:[#allocation7 + $0x24] sm:$0xf]
        %v675 = vld [vmem:[#allocation7 + $0x28] sm:$0xf]
        %v676 = vld [vmem:[#allocation7 + $0x2c] sm:$0xf]
        %v677 = vld [vmem:[#allocation7 + $0x30] sm:$0xf]
        %v678 = vld [vmem:[#allocation7 + $0x34] sm:$0xf]
        %v679 = vld [vmem:[#allocation7 + $0x38] sm:$0xf]
        %v680 = vld [vmem:[#allocation7 + $0x3c] sm:$0xf]
        %v681 = vld [vmem:[%s4] sm:$0x1]
        %v683 = vlaneseq
        %v684 = vshrl.u32 %v683, 7
        %v685 = vsub.s32 0, %v684
        %v686 = vrot.slane %v681, %v685
        %v704 = vunpack.c.l.b16 %v665
        %v705 = vunpack.c.l.b16 %v666
        %v706 = vunpack.c.l.b16 %v667
        %v707 = vunpack.c.l.b16 %v668
        %v708 = vunpack.c.l.b16 %v669
        %v709 = vunpack.c.l.b16 %v670
        %v710 = vunpack.c.l.b16 %v671
        %v711 = vunpack.c.l.b16 %v672
        %v712 = vunpack.c.l.b16 %v673
        %v713 = vunpack.c.l.b16 %v674
        %v714 = vunpack.c.l.b16 %v675
        %v715 = vunpack.c.l.b16 %v676
        %v716 = vunpack.c.l.b16 %v677
        %v717 = vunpack.c.l.b16 %v678
        %v718 = vunpack.c.l.b16 %v679
        %v719 = vunpack.c.l.b16 %v680
        %v720 = vpack.c.b16 %v705, %v704
        %v721 = vpack.c.b16 %v707, %v706
        %v722 = vpack.c.b16 %v709, %v708
        %v723 = vpack.c.b16 %v711, %v710
        %v724 = vpack.c.b16 %v713, %v712
        %v725 = vpack.c.b16 %v715, %v714
        %v726 = vpack.c.b16 %v717, %v716
        %v727 = vpack.c.b16 %v719, %v718
        %736 = vmatprep.subr.bf16.mxu0 0
        %737 = vmatpush1.bf16.msra.mxu0 %v727
        %738 = vmatprep.subr.bf16.mxu0 0
        %739 = vmatpush1.bf16.msra.mxu0 %v726
        %740 = vmatprep.subr.bf16.mxu0 0
        %741 = vmatpush1.bf16.msra.mxu0 %v725
        %742 = vmatprep.subr.bf16.mxu0 0
        %743 = vmatpush1.bf16.msra.mxu0 %v724
        %744 = vmatprep.subr.bf16.mxu0 0
        %745 = vmatpush1.bf16.msra.mxu0 %v723
        %746 = vmatprep.subr.bf16.mxu0 0
        %747 = vmatpush1.bf16.msra.mxu0 %v722
        %748 = vmatprep.subr.bf16.mxu0 0
        %749 = vmatpush1.bf16.msra.mxu0 %v721
        %750 = vmatprep.subr.bf16.mxu0 0
        %751 = vmatpush1.bf16.msra.mxu0 %v720
        %752 = vmatprep.subr.bf16.mxu0 0
        %753 = vmatpush2.bf16.msra.mxu0 0
        %754 = vmatprep.subr.bf16.mxu0 0
        %755 = vmatpush2.bf16.msra.mxu0 0
        %756 = vmatprep.subr.bf16.mxu0 0
        %757 = vmatpush2.bf16.msra.mxu0 0
        %758 = vmatprep.subr.bf16.mxu0 0
        %759 = vmatpush2.bf16.msra.mxu0 0
        %760 = vmatprep.subr.bf16.mxu0 0
        %761 = vmatpush2.bf16.msra.mxu0 0
        %762 = vmatprep.subr.bf16.mxu0 0
        %763 = vmatpush2.bf16.msra.mxu0 0
        %764 = vmatprep.subr.bf16.mxu0 0
        %765 = vmatpush2.bf16.msra.mxu0 0
        %766 = vmatprep.subr.bf16.mxu0 0
        %767 = vmatpush2.bf16.msra.mxu0 0
        %768 = vmatprep.mubr.bf16.mxu0 0
        %769 = vmatmul.mubr.bf16.gmra.mxu0 %v657
        %v770 = vpop.f32.mrf.mxu0
        %v771 = vadd.f32 %v686, %v770
        %v772 = vpop.f32.mrf.mxu0
        %v773 = vpop.f32.mrf.mxu0
        %v774 = vadd.f32 %v686, %v773
        %v775 = vpop.f32.mrf.mxu0
        %776 = vmatprep.mubr.bf16.mxu0 0
        %777 = vmatmul.mubr.bf16.gmra.mxu0 %v658
        %v778 = vpop.f32.mrf.mxu0
        %v779 = vadd.f32 %v686, %v778
        %v780 = vpop.f32.mrf.mxu0
        %v781 = vpop.f32.mrf.mxu0
        %v782 = vadd.f32 %v686, %v781
        %v783 = vpop.f32.mrf.mxu0
        %784 = vmatprep.mubr.bf16.mxu0 0
        %785 = vmatmul.mubr.bf16.gmra.mxu0 %v659
        %v786 = vpop.f32.mrf.mxu0
        %v787 = vadd.f32 %v686, %v786
        %v788 = vpop.f32.mrf.mxu0
        %v789 = vpop.f32.mrf.mxu0
        %v790 = vadd.f32 %v686, %v789
        %v791 = vpop.f32.mrf.mxu0
        %792 = vmatprep.mubr.bf16.mxu0 0
        %793 = vmatmul.mubr.bf16.gmra.mxu0 %v660
        %v794 = vpop.f32.mrf.mxu0
        %v795 = vadd.f32 %v686, %v794
        %v796 = vpop.f32.mrf.mxu0
        %v797 = vpop.f32.mrf.mxu0
        %v798 = vadd.f32 %v686, %v797
        %v799 = vpop.f32.mrf.mxu0
        %800 = vmatprep.mubr.bf16.mxu0 0
        %801 = vmatmul.mubr.bf16.gmra.mxu0 %v661
        %v802 = vpop.f32.mrf.mxu0
        %v803 = vadd.f32 %v686, %v802
        %v804 = vpop.f32.mrf.mxu0
        %v805 = vpop.f32.mrf.mxu0
        %v806 = vadd.f32 %v686, %v805
        %v807 = vpop.f32.mrf.mxu0
        %808 = vmatprep.mubr.bf16.mxu0 0
        %809 = vmatmul.mubr.bf16.gmra.mxu0 %v662
        %v810 = vpop.f32.mrf.mxu0
        %v811 = vadd.f32 %v686, %v810
        %v812 = vpop.f32.mrf.mxu0
        %v813 = vpop.f32.mrf.mxu0
        %v814 = vadd.f32 %v686, %v813
        %v815 = vpop.f32.mrf.mxu0
        %816 = vmatprep.mubr.bf16.mxu0 0
        %817 = vmatmul.mubr.bf16.gmra.mxu0 %v663
        %v818 = vpop.f32.mrf.mxu0
        %v819 = vadd.f32 %v686, %v818
        %v820 = vpop.f32.mrf.mxu0
        %v821 = vpop.f32.mrf.mxu0
        %v822 = vadd.f32 %v686, %v821
        %v823 = vpop.f32.mrf.mxu0
        %824 = vmatprep.mubr.bf16.mxu0 0
        %825 = vmatmul.mubr.bf16.gmra.mxu0 %v664
        %v826 = vpop.f32.mrf.mxu0
        %v827 = vadd.f32 %v686, %v826
        %v828 = vpop.f32.mrf.mxu0
        %v829 = vpop.f32.mrf.mxu0
        %v830 = vadd.f32 %v686, %v829
        %v831 = vpop.f32.mrf.mxu0
        %832 = vdwg.mxu0
        %v833 = vmul.f32 %v771, 0.5
        %v834 = vmul.f32 %v774, 0.5
        %v835 = vmul.f32 %v779, 0.5
        %v836 = vmul.f32 %v782, 0.5
        %v837 = vmul.f32 %v787, 0.5
        %v838 = vmul.f32 %v790, 0.5
        %v839 = vmul.f32 %v795, 0.5
        %v840 = vmul.f32 %v798, 0.5
        %v841 = vmul.f32 %v803, 0.5
        %v842 = vmul.f32 %v806, 0.5
        %v843 = vmul.f32 %v811, 0.5
        %v844 = vmul.f32 %v814, 0.5
        %v845 = vmul.f32 %v819, 0.5
        %v846 = vmul.f32 %v822, 0.5
        %v847 = vmul.f32 %v827, 0.5
        %v848 = vmul.f32 %v830, 0.5
        %v849 = vmul.f32 %v771, %v592
        %v850 = vmul.f32 %v774, %v592
        %v851 = vmul.f32 %v779, %v592
        %v852 = vmul.f32 %v782, %v592
        %v853 = vmul.f32 %v787, %v592
        %v854 = vmul.f32 %v790, %v592
        %v855 = vmul.f32 %v795, %v592
        %v856 = vmul.f32 %v798, %v592
        %v857 = vmul.f32 %v803, %v592
        %v858 = vmul.f32 %v806, %v592
        %v859 = vmul.f32 %v811, %v592
        %v860 = vmul.f32 %v814, %v592
        %v861 = vmul.f32 %v819, %v592
        %v862 = vmul.f32 %v822, %v592
        %v863 = vmul.f32 %v827, %v592
        %v864 = vmul.f32 %v830, %v592
        %v865 = verf.f32.pop %v849
        %v866 = verf.f32.pop %v850
        %v867 = verf.f32.pop %v851
        %v868 = verf.f32.pop %v852
        %v869 = verf.f32.pop %v853
        %v870 = verf.f32.pop %v854
        %v871 = verf.f32.pop %v855
        %v872 = verf.f32.pop %v856
        %v873 = verf.f32.pop %v857
        %v874 = verf.f32.pop %v858
        %v875 = verf.f32.pop %v859
        %v876 = verf.f32.pop %v860
        %v877 = verf.f32.pop %v861
        %v878 = verf.f32.pop %v862
        %v879 = verf.f32.pop %v863
        %v880 = verf.f32.pop %v864
        %v881 = vadd.f32 %v865, 1.0
        %v882 = vadd.f32 %v866, 1.0
        %v883 = vadd.f32 %v867, 1.0
        %v884 = vadd.f32 %v868, 1.0
        %v885 = vadd.f32 %v869, 1.0
        %v886 = vadd.f32 %v870, 1.0
        %v887 = vadd.f32 %v871, 1.0
        %v888 = vadd.f32 %v872, 1.0
        %v889 = vadd.f32 %v873, 1.0
        %v890 = vadd.f32 %v874, 1.0
        %v891 = vadd.f32 %v875, 1.0
        %v892 = vadd.f32 %v876, 1.0
        %v893 = vadd.f32 %v877, 1.0
        %v894 = vadd.f32 %v878, 1.0
        %v895 = vadd.f32 %v879, 1.0
        %v896 = vadd.f32 %v880, 1.0
        %v897 = vmul.f32 %v833, %v881
        %v898 = vmul.f32 %v834, %v882
        %v899 = vmul.f32 %v835, %v883
        %v900 = vmul.f32 %v836, %v884
        %v901 = vmul.f32 %v837, %v885
        %v902 = vmul.f32 %v838, %v886
        %v903 = vmul.f32 %v839, %v887
        %v904 = vmul.f32 %v840, %v888
        %v905 = vmul.f32 %v841, %v889
        %v906 = vmul.f32 %v842, %v890
        %v907 = vmul.f32 %v843, %v891
        %v908 = vmul.f32 %v844, %v892
        %v909 = vmul.f32 %v845, %v893
        %v910 = vmul.f32 %v846, %v894
        %v911 = vmul.f32 %v847, %v895
        %v912 = vmul.f32 %v848, %v896
        %v913 = vpack.c.bf16 %v898, %v897
        %v914 = vpack.c.bf16 %v900, %v899
        %v915 = vpack.c.bf16 %v902, %v901
        %v916 = vpack.c.bf16 %v904, %v903
        %v917 = vpack.c.bf16 %v906, %v905
        %v918 = vpack.c.bf16 %v908, %v907
        %v919 = vpack.c.bf16 %v910, %v909
        %v920 = vpack.c.bf16 %v912, %v911
        %v921 = vld [vmem:[#allocation8] sm:$0xf]
        %v922 = vld [vmem:[#allocation8 + $0x4] sm:$0xf]
        %v923 = vld [vmem:[#allocation8 + $0x8] sm:$0xf]
        %v924 = vld [vmem:[#allocation8 + $0xc] sm:$0xf]
        %v925 = vld [vmem:[#allocation8 + $0x10] sm:$0xf]
        %v926 = vld [vmem:[#allocation8 + $0x14] sm:$0xf]
        %v927 = vld [vmem:[#allocation8 + $0x18] sm:$0xf]
        %v928 = vld [vmem:[#allocation8 + $0x1c] sm:$0xf]
        %v929 = vld [vmem:[#allocation8 + $0x20] sm:$0xf]
        %v930 = vld [vmem:[#allocation8 + $0x24] sm:$0xf]
        %v931 = vld [vmem:[#allocation8 + $0x28] sm:$0xf]
        %v932 = vld [vmem:[#allocation8 + $0x2c] sm:$0xf]
        %v933 = vld [vmem:[#allocation8 + $0x30] sm:$0xf]
        %v934 = vld [vmem:[#allocation8 + $0x34] sm:$0xf]
        %v935 = vld [vmem:[#allocation8 + $0x38] sm:$0xf]
        %v936 = vld [vmem:[#allocation8 + $0x3c] sm:$0xf]
        %v937 = vld [vmem:[%s6] sm:$0x1]
        %v939 = vlaneseq
        %v940 = vshrl.u32 %v939, 7
        %v941 = vsub.s32 0, %v940
        %v942 = vrot.slane %v937, %v941
        %v960 = vunpack.c.l.b16 %v921
        %v961 = vunpack.c.l.b16 %v922
        %v962 = vunpack.c.l.b16 %v923
        %v963 = vunpack.c.l.b16 %v924
        %v964 = vunpack.c.l.b16 %v925
        %v965 = vunpack.c.l.b16 %v926
        %v966 = vunpack.c.l.b16 %v927
        %v967 = vunpack.c.l.b16 %v928
        %v968 = vunpack.c.l.b16 %v929
        %v969 = vunpack.c.l.b16 %v930
        %v970 = vunpack.c.l.b16 %v931
        %v971 = vunpack.c.l.b16 %v932
        %v972 = vunpack.c.l.b16 %v933
        %v973 = vunpack.c.l.b16 %v934
        %v974 = vunpack.c.l.b16 %v935
        %v975 = vunpack.c.l.b16 %v936
        %v976 = vpack.c.b16 %v961, %v960
        %v977 = vpack.c.b16 %v963, %v962
        %v978 = vpack.c.b16 %v965, %v964
        %v979 = vpack.c.b16 %v967, %v966
        %v980 = vpack.c.b16 %v969, %v968
        %v981 = vpack.c.b16 %v971, %v970
        %v982 = vpack.c.b16 %v973, %v972
        %v983 = vpack.c.b16 %v975, %v974
        %992 = vmatprep.subr.bf16.mxu0 0
        %993 = vmatpush1.bf16.msra.mxu0 %v983
        %994 = vmatprep.subr.bf16.mxu0 0
        %995 = vmatpush1.bf16.msra.mxu0 %v982
        %996 = vmatprep.subr.bf16.mxu0 0
        %997 = vmatpush1.bf16.msra.mxu0 %v981
        %998 = vmatprep.subr.bf16.mxu0 0
        %999 = vmatpush1.bf16.msra.mxu0 %v980
        %1000 = vmatprep.subr.bf16.mxu0 0
        %1001 = vmatpush1.bf16.msra.mxu0 %v979
        %1002 = vmatprep.subr.bf16.mxu0 0
        %1003 = vmatpush1.bf16.msra.mxu0 %v978
        %1004 = vmatprep.subr.bf16.mxu0 0
        %1005 = vmatpush1.bf16.msra.mxu0 %v977
        %1006 = vmatprep.subr.bf16.mxu0 0
        %1007 = vmatpush1.bf16.msra.mxu0 %v976
        %1008 = vmatprep.subr.bf16.mxu0 0
        %1009 = vmatpush2.bf16.msra.mxu0 0
        %1010 = vmatprep.subr.bf16.mxu0 0
        %1011 = vmatpush2.bf16.msra.mxu0 0
        %1012 = vmatprep.subr.bf16.mxu0 0
        %1013 = vmatpush2.bf16.msra.mxu0 0
        %1014 = vmatprep.subr.bf16.mxu0 0
        %1015 = vmatpush2.bf16.msra.mxu0 0
        %1016 = vmatprep.subr.bf16.mxu0 0
        %1017 = vmatpush2.bf16.msra.mxu0 0
        %1018 = vmatprep.subr.bf16.mxu0 0
        %1019 = vmatpush2.bf16.msra.mxu0 0
        %1020 = vmatprep.subr.bf16.mxu0 0
        %1021 = vmatpush2.bf16.msra.mxu0 0
        %1022 = vmatprep.subr.bf16.mxu0 0
        %1023 = vmatpush2.bf16.msra.mxu0 0
        %1024 = vmatprep.mubr.bf16.mxu0 0
        %1025 = vmatmul.mubr.bf16.gmra.mxu0 %v913
        %v1026 = vpop.f32.mrf.mxu0
        %v1027 = vadd.f32 %v942, %v1026
        %v1028 = vpop.f32.mrf.mxu0
        %v1029 = vpop.f32.mrf.mxu0
        %v1030 = vadd.f32 %v942, %v1029
        %v1031 = vpop.f32.mrf.mxu0
        %1032 = vmatprep.mubr.bf16.mxu0 0
        %1033 = vmatmul.mubr.bf16.gmra.mxu0 %v914
        %v1034 = vpop.f32.mrf.mxu0
        %v1035 = vadd.f32 %v942, %v1034
        %v1036 = vpop.f32.mrf.mxu0
        %v1037 = vpop.f32.mrf.mxu0
        %v1038 = vadd.f32 %v942, %v1037
        %v1039 = vpop.f32.mrf.mxu0
        %1040 = vmatprep.mubr.bf16.mxu0 0
        %1041 = vmatmul.mubr.bf16.gmra.mxu0 %v915
        %v1042 = vpop.f32.mrf.mxu0
        %v1043 = vadd.f32 %v942, %v1042
        %v1044 = vpop.f32.mrf.mxu0
        %v1045 = vpop.f32.mrf.mxu0
        %v1046 = vadd.f32 %v942, %v1045
        %v1047 = vpop.f32.mrf.mxu0
        %1048 = vmatprep.mubr.bf16.mxu0 0
        %1049 = vmatmul.mubr.bf16.gmra.mxu0 %v916
        %v1050 = vpop.f32.mrf.mxu0
        %v1051 = vadd.f32 %v942, %v1050
        %v1052 = vpop.f32.mrf.mxu0
        %v1053 = vpop.f32.mrf.mxu0
        %v1054 = vadd.f32 %v942, %v1053
        %v1055 = vpop.f32.mrf.mxu0
        %1056 = vmatprep.mubr.bf16.mxu0 0
        %1057 = vmatmul.mubr.bf16.gmra.mxu0 %v917
        %v1058 = vpop.f32.mrf.mxu0
        %v1059 = vadd.f32 %v942, %v1058
        %v1060 = vpop.f32.mrf.mxu0
        %v1061 = vpop.f32.mrf.mxu0
        %v1062 = vadd.f32 %v942, %v1061
        %v1063 = vpop.f32.mrf.mxu0
        %1064 = vmatprep.mubr.bf16.mxu0 0
        %1065 = vmatmul.mubr.bf16.gmra.mxu0 %v918
        %v1066 = vpop.f32.mrf.mxu0
        %v1067 = vadd.f32 %v942, %v1066
        %v1068 = vpop.f32.mrf.mxu0
        %v1069 = vpop.f32.mrf.mxu0
        %v1070 = vadd.f32 %v942, %v1069
        %v1071 = vpop.f32.mrf.mxu0
        %1072 = vmatprep.mubr.bf16.mxu0 0
        %1073 = vmatmul.mubr.bf16.gmra.mxu0 %v919
        %v1074 = vpop.f32.mrf.mxu0
        %v1075 = vadd.f32 %v942, %v1074
        %v1076 = vpop.f32.mrf.mxu0
        %v1077 = vpop.f32.mrf.mxu0
        %v1078 = vadd.f32 %v942, %v1077
        %v1079 = vpop.f32.mrf.mxu0
        %1080 = vmatprep.mubr.bf16.mxu0 0
        %1081 = vmatmul.mubr.bf16.gmra.mxu0 %v920
        %v1082 = vpop.f32.mrf.mxu0
        %v1083 = vadd.f32 %v942, %v1082
        %v1084 = vpop.f32.mrf.mxu0
        %v1085 = vpop.f32.mrf.mxu0
        %v1086 = vadd.f32 %v942, %v1085
        %v1087 = vpop.f32.mrf.mxu0
        %1088 = vdwg.mxu0
        %1089 = vst [vmem:[%s340] sm:$0xff] %v1027
        %1090 = vst [vmem:[%s340 + $0x8] sm:$0xff] %v1030
        %1091 = vst [vmem:[%s340 + $0x10] sm:$0xff] %v1035
        %1092 = vst [vmem:[%s340 + $0x18] sm:$0xff] %v1038
        %1093 = vst [vmem:[%s340 + $0x20] sm:$0xff] %v1043
        %1094 = vst [vmem:[%s340 + $0x28] sm:$0xff] %v1046
        %1095 = vst [vmem:[%s340 + $0x30] sm:$0xff] %v1051
        %1096 = vst [vmem:[%s340 + $0x38] sm:$0xff] %v1054
        %1097 = vst [vmem:[%s340 + $0x40] sm:$0xff] %v1059
        %1098 = vst [vmem:[%s340 + $0x48] sm:$0xff] %v1062
        %1099 = vst [vmem:[%s340 + $0x50] sm:$0xff] %v1067
        %1100 = vst [vmem:[%s340 + $0x58] sm:$0xff] %v1070
        %1101 = vst [vmem:[%s340 + $0x60] sm:$0xff] %v1075
        %1102 = vst [vmem:[%s340 + $0x68] sm:$0xff] %v1078
        %1103 = vst [vmem:[%s340 + $0x70] sm:$0xff] %v1083
        %1104 = vst [vmem:[%s340 + $0x78] sm:$0xff] %v1086
        %s1105 = sand.u32 %s186, 1
        %s1106 = scalar_lea.sflag [#allocation4], %s1105
        %s1107 = sand.u32 %s186, 1
        %s1108 = smul.addr %s1107, 128
        %s1109 = scalar_lea.vmem [#allocation10], %s1108
        // Predicated region
        $region65: #{tpu_custom_call.1} parent=47 // pred_check
          %p1110 = pneg %p196
        $region66: #{tpu_custom_call.1} parent=47 // pred_check_branch
          %1112 = sbr.rel (%p1110) target = $region68
        $region67: #{tpu_custom_call.1} parent=47 // pred_region
          %s1113 = smul.u32 16, %s26
          %s1115 = ssub.s32 2048, 2048
          %1116 = vsyncadd %s1106, %s1115
          %s1117 = smul.addr %s1113, 128
          %s1118 = scalar_lea.hbm %s7, %s1117
          %s1119 = sshll.u32 %s1109, 4
          %s1120 = int_to_ptr.vmem [resolvable:$true] %s1119
          %1125 = dma.vmem_to_hbm [thread:$0]  %s1120, 2048, %s1118, %s1106, 128, 128, 8
        $region68: #{tpu_custom_call.1} parent=47 // pred_fallthru
          _
      $region48: #{tpu_custom_call.1} parent=5 // pred_fallthru
        _
      %p1126 = scmp.le.s32.totalorder 2, %s21
      // Predicated region
      $region69: #{tpu_custom_call.1} parent=5 // pred_check
        %p1127 = pneg %p1126
      $region70: #{tpu_custom_call.1} parent=5 // pred_check_branch
        %1129 = sbr.rel (%p1127) target = $region72
      $region71: #{tpu_custom_call.1} parent=5 // pred_region
        %s1130 = ssub.s32 %s21, 2
        // Predicated region
        $region73: #{tpu_custom_call.1} parent=71 // pred_check
          %p1131 = pneg %p202
        $region74: #{tpu_custom_call.1} parent=71 // pred_check_branch
          %1133 = sbr.rel (%p1131) target = $region76
        $region75: #{tpu_custom_call.1} parent=71 // pred_region
          %s1134 = sand.u32 %s187, 1
          %s1135 = scalar_lea.sflag [#allocation4], %s1134
          %s1136 = sand.u32 %s187, 1
          %s1137 = smul.addr %s1136, 128
          %s1138 = scalar_lea.vmem [#allocation10], %s1137
          %1139 = dma.done %s1135, 2048
        $region76: #{tpu_custom_call.1} parent=71 // pred_fallthru
          _
      $region72: #{tpu_custom_call.1} parent=5 // pred_fallthru
        _
    $region6: #{tpu_custom_call.1} parent=1 // loop_footer
      %s25 = sadd.s32 1, %s21
    $region7: #{tpu_custom_call.1} parent=1 // loop_footer_branch
      %20 = sbr.rel target = $region3
    $region8: #{tpu_custom_call.1} parent=1 // loop_exit
      _
    %1140 = vsyncpa [#allocation3], 1
    %s1141 = scalar_lea.sflag [#allocation3], 1
    %1142 = vsyncpa %s1141, 1
    %1143 = vsyncpa [#allocation6], 1
    %1144 = vsyncpa [#allocation9], 1
    %1145 = vsyncpa [#allocation4], 1
    %s1146 = scalar_lea.sflag [#allocation4], 1
    %1147 = vsyncpa %s1146, 1

</llo_original>
